<compile_context>
chip_gen: v6e
topology: v6e:2x2x1
jax: 0.10.0
libtpu: 0.0.40
codegen_flags: <defaults>
</compile_context>

<pallas_src>
import functools

import jax
import jax.numpy as jnp
from jax.experimental import pallas as pl
from jax.experimental.pallas import tpu as pltpu


def _auvi_kernel(x_ref, wih_ref, whh_ref, b_ref, wconv_ref, out_ref, hall_ref):
    """LSTM recurrence + tap-accumulated Conv1d for one batch tile.

    x_ref:     (T, BT, in)     time-major input tile (BT % 8 == 0)
    wih_ref:   (in, 4H)        W_ih^T                (mxu dtype)
    whh_ref:   (H, 4H)         W_hh^T                (mxu dtype)
    b_ref:     (1, 4H)         b_ih + b_hh           (f32)
    wconv_ref: (k*H, DSTP)     conv weight, tap-major rows, lane-padded to DSTP
    out_ref:   (T_out, BT, DSTP)
    hall_ref:  (T*BT, H)       all hidden states, rows ordered (t, b)  (f32 scratch)
    """
    T, BT, in_size = x_ref.shape
    H = whh_ref.shape[0]
    kH, DSTP = wconv_ref.shape
    k = kH // H
    T_out = T - k + 1
    mxu_dtype = x_ref.dtype

    # ---- Hoisted input projection: ONE (T*BT, in) x (in, 4H) MXU matmul, bias folded.
    #      The reshape merges the leading dim into sublanes; BT % 8 == 0 keeps it
    #      tile-aligned (no relayout).
    x_flat = x_ref[...].reshape(T * BT, in_size)
    gx = (jnp.dot(x_flat, wih_ref[...], preferred_element_type=jnp.float32)
          + b_ref[...])                                              # (T*BT, 4H) f32

    # ---- Hoisted per-lane constants for the single-tanh gate activation.
    #      PyTorch gate order i, f, g, o: lanes [2H, 3H) are the tanh gate (g),
    #      all other lanes are sigmoid via sigmoid(x) = 0.5 * tanh(0.5 * x) + 0.5.
    lane = jax.lax.broadcasted_iota(jnp.int32, (BT, 4 * H), 1)
    is_g = jnp.logical_and(lane >= 2 * H, lane < 3 * H)
    gate_scale = jnp.where(is_g, 1.0, 0.5).astype(jnp.float32)   # pre- and post-scale
    gate_shift = jnp.where(is_g, 0.0, 0.5).astype(jnp.float32)

    whh = whh_ref[...]
    h = jnp.zeros((BT, H), jnp.float32)
    c = jnp.zeros((BT, H), jnp.float32)

    # ---- Statically unrolled LSTM recurrence (T is small & static here).
    for t in range(T):
        gates = gx[t * BT:(t + 1) * BT, :] + jnp.dot(
            h.astype(mxu_dtype), whh, preferred_element_type=jnp.float32)   # (BT, 4H)
        act = jnp.tanh(gates * gate_scale) * gate_scale + gate_shift        # one EUP push
        i_g = act[:, 0:H]
        f_g = act[:, H:2 * H]
        g_g = act[:, 2 * H:3 * H]
        o_g = act[:, 3 * H:4 * H]
        c = f_g * c + i_g * g_g
        h = o_g * jnp.tanh(c)
        hall_ref[t * BT:(t + 1) * BT, :] = h                 # static, sublane-aligned

    # ---- Conv1d (no bias): k accumulated tap matmuls, no stacked-tap copy.
    #      Tap j for output step t0 is rows [(t0+j)*BT, (t0+j+1)*BT) of hall_ref,
    #      so tap j's operand is the contiguous row block [j*BT, (j+T_out)*BT).
    acc = jnp.zeros((T_out * BT, DSTP), jnp.float32)
    for j in range(k):
        taps = hall_ref[j * BT:(j + T_out) * BT, :].astype(mxu_dtype)
        acc = acc + jnp.dot(taps, wconv_ref[j * H:(j + 1) * H, :],
                            preferred_element_type=jnp.float32)
    out_ref[...] = acc.reshape(T_out, BT, DSTP).astype(out_ref.dtype)   # lane-dense store


@functools.partial(jax.jit, static_argnames=("conv_kernel_size", "mxu_dtype"))
def auvi_subnet_forward(x, lengths, w_ih, w_hh, b_ih, b_hh, w_conv, *,
                        conv_kernel_size, mxu_dtype=jnp.float32):
    """x: (B, T, in_size). Returns (B, dst_feature_dims, T - k + 1) like PyTorch.

    mxu_dtype=jnp.bfloat16 enables bf16 MXU operands (f32 accumulation, f32 state);
    recommended on v6e/v7x, ~1e-3-level deviation from the f32 reference.
    """
    del lengths  # unused by the reference forward (no sequence packing)
    B, T, in_size = x.shape
    H = w_hh.shape[1]
    dst = w_conv.shape[0]
    k = conv_kernel_size
    T_out = T - k + 1

    BT = 8                                    # batch tile = one sublane tile
    B_pad = ((B + BT - 1) // BT) * BT
    DSTP = ((dst + 127) // 128) * 128         # lane-dense output width

    # Glue (tiny tensors): time-major input padded to a sublane-aligned batch,
    # row-major pre-transposed weights, conv weight tap-major + lane-padded.
    x_tm = jnp.transpose(x, (1, 0, 2)).astype(mxu_dtype)              # (T, B, in)
    if B_pad != B:
        x_tm = jnp.pad(x_tm, ((0, 0), (0, B_pad - B), (0, 0)))
    wih_t = jnp.transpose(w_ih).astype(mxu_dtype)                     # (in, 4H)
    whh_t = jnp.transpose(w_hh).astype(mxu_dtype)                     # (H, 4H)
    bias = (b_ih + b_hh).reshape(1, 4 * H).astype(jnp.float32)        # (1, 4H)
    wconv_flat = (jnp.transpose(w_conv, (2, 1, 0))                    # (k, H, dst)
                  .reshape(k * H, dst))
    wconv_flat = jnp.pad(wconv_flat, ((0, 0), (0, DSTP - dst))).astype(mxu_dtype)

    grid_spec = pltpu.PrefetchScalarGridSpec(
        num_scalar_prefetch=0,
        grid=(B_pad // BT,),                                  # batch tiles, independent
        in_specs=[
            pl.BlockSpec((T, BT, in_size), lambda b: (0, b, 0)),
            pl.BlockSpec((in_size, 4 * H), lambda b: (0, 0)),
            pl.BlockSpec((H, 4 * H), lambda b: (0, 0)),
            pl.BlockSpec((1, 4 * H), lambda b: (0, 0)),
            pl.BlockSpec((k * H, DSTP), lambda b: (0, 0)),
        ],
        out_specs=pl.BlockSpec((T_out, BT, DSTP), lambda b: (0, b, 0)),
        scratch_shapes=[pltpu.VMEM((T * BT, H), jnp.float32)],        # all hidden states
    )

    out_full = pl.pallas_call(
        _auvi_kernel,
        out_shape=jax.ShapeDtypeStruct((T_out, B_pad, DSTP), jnp.float32),
        grid_spec=grid_spec,
        compiler_params=pltpu.CompilerParams(
            dimension_semantics=("parallel",),                # split batch across TCs
            vmem_limit_bytes=32 * 1024 * 1024),               # safe on v5e/v6e/v7x
    )(x_tm, wih_t, whh_t, bias, wconv_flat)

    # (T_out, B_pad, DSTP) -> un-pad -> (B, dst, T_out)  (Conv1d NCL output).
    out = out_full[:, :B, :dst]
    return jnp.transpose(out, (1, 2, 0))


def _reference_forward(x, w_ih, w_hh, b_ih, b_hh, w_conv):
    """Pure-JAX f32 reference matching PyTorch LSTM + Conv1d semantics."""
    B, T, _ = x.shape
    H = w_hh.shape[1]
    k = w_conv.shape[2]
    T_out = T - k + 1

    def step(carry, x_t):
        h, c = carry
        gates = x_t @ w_ih.T + h @ w_hh.T + b_ih + b_hh
        i = jax.nn.sigmoid(gates[:, 0 * H:1 * H])
        f = jax.nn.sigmoid(gates[:, 1 * H:2 * H])
        g = jnp.tanh(gates[:, 2 * H:3 * H])
        o = jax.nn.sigmoid(gates[:, 3 * H:4 * H])
        c = f * c + i * g
        h = o * jnp.tanh(c)
        return (h, c), h

    init = (jnp.zeros((B, H), jnp.float32), jnp.zeros((B, H), jnp.float32))
    _, hs = jax.lax.scan(step, init, jnp.transpose(x, (1, 0, 2)))     # (T, B, H)
    hs = jnp.transpose(hs, (1, 0, 2))                                 # (B, T, H)

    out = jnp.zeros((B, T_out, w_conv.shape[0]), jnp.float32)
    for j in range(k):
        out = out + hs[:, j:j + T_out, :] @ w_conv[:, :, j].T
    return jnp.transpose(out, (0, 2, 1))                              # (B, dst, T_out)


if __name__ == "__main__":
    # Small shapes consistent with the module's forward.
    B, T = 2, 8
    in_size, hidden_size = 20, 32
    conv1d_kernel_size, dst_feature_dims = 3, 32

    key = jax.random.PRNGKey(0)
    kx, k1, k2, k3, k4, k5 = jax.random.split(key, 6)

    x = jax.random.normal(kx, (B, T, in_size), jnp.float32)
    lengths = jnp.full((B,), T, jnp.int32)  # accepted but unused, as in the PyTorch forward

    # PyTorch-style uniform(-1/sqrt(H), 1/sqrt(H)) init for LSTM weights.
    s = 1.0 / jnp.sqrt(jnp.float32(hidden_size))
    w_ih = jax.random.uniform(k1, (4 * hidden_size, in_size), jnp.float32, -s, s)
    w_hh = jax.random.uniform(k2, (4 * hidden_size, hidden_size), jnp.float32, -s, s)
    b_ih = jax.random.uniform(k3, (4 * hidden_size,), jnp.float32, -s, s)
    b_hh = jax.random.uniform(k4, (4 * hidden_size,), jnp.float32, -s, s)
    sc = 1.0 / jnp.sqrt(jnp.float32(hidden_size * conv1d_kernel_size))
    w_conv = jax.random.uniform(
        k5, (dst_feature_dims, hidden_size, conv1d_kernel_size), jnp.float32, -sc, sc)

    ref = _reference_forward(x, w_ih, w_hh, b_ih, b_hh, w_conv)
    expected_shape = (B, dst_feature_dims, T - conv1d_kernel_size + 1)

    # f32 path: matches the PyTorch/f32 reference tightly.
    out_f32 = auvi_subnet_forward(x, lengths, w_ih, w_hh, b_ih, b_hh, w_conv,
                                  conv_kernel_size=conv1d_kernel_size,
                                  mxu_dtype=jnp.float32)
    out_f32 = jax.block_until_ready(out_f32)
    assert out_f32.shape == expected_shape, out_f32.shape
    assert jnp.allclose(out_f32, ref, rtol=1e-4, atol=1e-4), \
        float(jnp.max(jnp.abs(out_f32 - ref)))

    # bf16-MXU path (recommended on v6e/v7x): f32 state/accumulation, looser tolerance.
    out_bf16 = auvi_subnet_forward(x, lengths, w_ih, w_hh, b_ih, b_hh, w_conv,
                                   conv_kernel_size=conv1d_kernel_size,
                                   mxu_dtype=jnp.bfloat16)
    out_bf16 = jax.block_until_ready(out_bf16)
    assert out_bf16.shape == expected_shape, out_bf16.shape
    assert jnp.allclose(out_bf16, ref, rtol=5e-2, atol=5e-2), \
        float(jnp.max(jnp.abs(out_bf16 - ref)))

    print("KERNEL_OK")
</pallas_src>

<mosaic_0001>
module attributes {stable_mosaic.version = 11 : i64} {
  func.func @_auvi_kernel(%arg0: i32, %arg1: memref<8x8x20xf32, #tpu.memory_space<vmem>>, %arg2: memref<20x128xf32, #tpu.memory_space<vmem>>, %arg3: memref<32x128xf32, #tpu.memory_space<vmem>>, %arg4: memref<1x128xf32, #tpu.memory_space<vmem>>, %arg5: memref<96x128xf32, #tpu.memory_space<vmem>>, %arg6: memref<6x8x128xf32, #tpu.memory_space<vmem>>, %arg7: memref<64x32xf32, #tpu.memory_space<vmem>>) attributes {dimension_semantics = [#tpu.dimension_semantics<parallel>], iteration_bounds = array<i64: 1>, scalar_prefetch = 0 : i64, scratch_operands = 1 : i64, tpu.core_type = #tpu.core_type<tc>, window_params = [{transform_indices = @transform_0, window_bounds = array<i64: 8, 8, 20>}, {pipeline_mode = #tpu.pipeline_mode<synchronous>, transform_indices = @transform_1, window_bounds = array<i64: 20, 128>}, {pipeline_mode = #tpu.pipeline_mode<synchronous>, transform_indices = @transform_2, window_bounds = array<i64: 32, 128>}, {pipeline_mode = #tpu.pipeline_mode<synchronous>, transform_indices = @transform_3, window_bounds = array<i64: 1, 128>}, {pipeline_mode = #tpu.pipeline_mode<synchronous>, transform_indices = @transform_4, window_bounds = array<i64: 96, 128>}, {transform_indices = @transform_5, window_bounds = array<i64: 6, 8, 128>}]} {
    %c0 = arith.constant 0 : index
    %c0_0 = arith.constant 0 : index
    %c0_1 = arith.constant 0 : index
    %0 = vector.load %arg1[%c0, %c0_0, %c0_1] : memref<8x8x20xf32, #tpu.memory_space<vmem>>, vector<8x8x20xf32>
    %1 = vector.shape_cast %0 : vector<8x8x20xf32> to vector<64x20xf32>
    %c0_2 = arith.constant 0 : index
    %c0_3 = arith.constant 0 : index
    %2 = vector.load %arg2[%c0_2, %c0_3] : memref<20x128xf32, #tpu.memory_space<vmem>>, vector<20x128xf32>
    %cst = arith.constant dense<0.000000e+00> : vector<64x128xf32>
    %3 = tpu.matmul %1, %2, %cst {dimension_numbers = #tpu.dot_dimension_numbers<[1], [0], [0], [1], [0, 0, 1, 1], [], []>} : vector<64x20xf32>, vector<20x128xf32>, vector<64x128xf32> -> vector<64x128xf32>
    %c0_4 = arith.constant 0 : index
    %c0_5 = arith.constant 0 : index
    %4 = vector.load %arg4[%c0_4, %c0_5] : memref<1x128xf32, #tpu.memory_space<vmem>>, vector<1x128xf32>
    %5 = vector.broadcast %4 : vector<1x128xf32> to vector<64x128xf32>
    %6 = arith.addf %3, %5 : vector<64x128xf32>
    %7 = tpu.iota {dimensions = array<i32: 1>} : vector<8x128xi32>
    %c64_i32 = arith.constant 64 : i32
    %8 = vector.broadcast %c64_i32 : i32 to vector<8x128xi32>
    %9 = arith.cmpi sge, %7, %8 : vector<8x128xi32>
    %c96_i32 = arith.constant 96 : i32
    %10 = vector.broadcast %c96_i32 : i32 to vector<8x128xi32>
    %11 = arith.cmpi slt, %7, %10 : vector<8x128xi32>
    %12 = arith.andi %9, %11 : vector<8x128xi1>
    %cst_6 = arith.constant 1.000000e+00 : f32
    %cst_7 = arith.constant 5.000000e-01 : f32
    %13 = vector.broadcast %cst_6 : f32 to vector<8x128xf32>
    %14 = vector.broadcast %cst_7 : f32 to vector<8x128xf32>
    %15 = arith.select %12, %13, %14 : vector<8x128xi1>, vector<8x128xf32>
    %cst_8 = arith.constant 0.000000e+00 : f32
    %cst_9 = arith.constant 5.000000e-01 : f32
    %16 = vector.broadcast %cst_8 : f32 to vector<8x128xf32>
    %17 = vector.broadcast %cst_9 : f32 to vector<8x128xf32>
    %18 = arith.select %12, %16, %17 : vector<8x128xi1>, vector<8x128xf32>
    %c0_10 = arith.constant 0 : index
    %c0_11 = arith.constant 0 : index
    %19 = vector.load %arg3[%c0_10, %c0_11] : memref<32x128xf32, #tpu.memory_space<vmem>>, vector<32x128xf32>
    %cst_12 = arith.constant 0.000000e+00 : f32
    %20 = vector.broadcast %cst_12 : f32 to vector<8x32xf32>
    %cst_13 = arith.constant 0.000000e+00 : f32
    %21 = vector.broadcast %cst_13 : f32 to vector<8x32xf32>
    %22 = vector.extract_strided_slice %6 {offsets = [0, 0], sizes = [8, 128], strides = [1, 1]} : vector<64x128xf32> to vector<8x128xf32>
    %cst_14 = arith.constant dense<0.000000e+00> : vector<8x128xf32>
    %23 = tpu.matmul %20, %19, %cst_14 {dimension_numbers = #tpu.dot_dimension_numbers<[1], [0], [0], [1], [0, 0, 1, 1], [], []>} : vector<8x32xf32>, vector<32x128xf32>, vector<8x128xf32> -> vector<8x128xf32>
    %24 = arith.addf %22, %23 : vector<8x128xf32>
    %25 = arith.mulf %24, %15 : vector<8x128xf32>
    %26 = math.tanh %25 : vector<8x128xf32>
    %27 = arith.mulf %26, %15 : vector<8x128xf32>
    %28 = arith.addf %27, %18 : vector<8x128xf32>
    %29 = vector.extract_strided_slice %28 {offsets = [0, 0], sizes = [8, 32], strides = [1, 1]} : vector<8x128xf32> to vector<8x32xf32>
    %30 = vector.extract_strided_slice %28 {offsets = [0, 32], sizes = [8, 32], strides = [1, 1]} : vector<8x128xf32> to vector<8x32xf32>
    %31 = vector.extract_strided_slice %28 {offsets = [0, 64], sizes = [8, 32], strides = [1, 1]} : vector<8x128xf32> to vector<8x32xf32>
    %32 = vector.extract_strided_slice %28 {offsets = [0, 96], sizes = [8, 32], strides = [1, 1]} : vector<8x128xf32> to vector<8x32xf32>
    %33 = arith.mulf %30, %21 : vector<8x32xf32>
    %34 = arith.mulf %29, %31 : vector<8x32xf32>
    %35 = arith.addf %33, %34 : vector<8x32xf32>
    %36 = math.tanh %35 : vector<8x32xf32>
    %37 = arith.mulf %32, %36 : vector<8x32xf32>
    %c0_15 = arith.constant 0 : index
    %c0_16 = arith.constant 0 : index
    %38 = vector.load %arg7[%c0_15, %c0_16] : memref<64x32xf32, #tpu.memory_space<vmem>>, vector<8x32xf32>
    tpu.vector_store %arg7[%c0_15, %c0_16], %37 {strides = array<i32>} : memref<64x32xf32, #tpu.memory_space<vmem>>, vector<8x32xf32>,
    %39 = vector.extract_strided_slice %6 {offsets = [8, 0], sizes = [8, 128], strides = [1, 1]} : vector<64x128xf32> to vector<8x128xf32>
    %cst_17 = arith.constant dense<0.000000e+00> : vector<8x128xf32>
    %40 = tpu.matmul %37, %19, %cst_17 {dimension_numbers = #tpu.dot_dimension_numbers<[1], [0], [0], [1], [0, 0, 1, 1], [], []>} : vector<8x32xf32>, vector<32x128xf32>, vector<8x128xf32> -> vector<8x128xf32>
    %41 = arith.addf %39, %40 : vector<8x128xf32>
    %42 = arith.mulf %41, %15 : vector<8x128xf32>
    %43 = math.tanh %42 : vector<8x128xf32>
    %44 = arith.mulf %43, %15 : vector<8x128xf32>
    %45 = arith.addf %44, %18 : vector<8x128xf32>
    %46 = vector.extract_strided_slice %45 {offsets = [0, 0], sizes = [8, 32], strides = [1, 1]} : vector<8x128xf32> to vector<8x32xf32>
    %47 = vector.extract_strided_slice %45 {offsets = [0, 32], sizes = [8, 32], strides = [1, 1]} : vector<8x128xf32> to vector<8x32xf32>
    %48 = vector.extract_strided_slice %45 {offsets = [0, 64], sizes = [8, 32], strides = [1, 1]} : vector<8x128xf32> to vector<8x32xf32>
    %49 = vector.extract_strided_slice %45 {offsets = [0, 96], sizes = [8, 32], strides = [1, 1]} : vector<8x128xf32> to vector<8x32xf32>
    %50 = arith.mulf %47, %35 : vector<8x32xf32>
    %51 = arith.mulf %46, %48 : vector<8x32xf32>
    %52 = arith.addf %50, %51 : vector<8x32xf32>
    %53 = math.tanh %52 : vector<8x32xf32>
    %54 = arith.mulf %49, %53 : vector<8x32xf32>
    %c8 = arith.constant 8 : index
    %c0_18 = arith.constant 0 : index
    %55 = vector.load %arg7[%c8, %c0_18] : memref<64x32xf32, #tpu.memory_space<vmem>>, vector<8x32xf32>
    tpu.vector_store %arg7[%c8, %c0_18], %54 {strides = array<i32>} : memref<64x32xf32, #tpu.memory_space<vmem>>, vector<8x32xf32>,
    %56 = vector.extract_strided_slice %6 {offsets = [16, 0], sizes = [8, 128], strides = [1, 1]} : vector<64x128xf32> to vector<8x128xf32>
    %cst_19 = arith.constant dense<0.000000e+00> : vector<8x128xf32>
    %57 = tpu.matmul %54, %19, %cst_19 {dimension_numbers = #tpu.dot_dimension_numbers<[1], [0], [0], [1], [0, 0, 1, 1], [], []>} : vector<8x32xf32>, vector<32x128xf32>, vector<8x128xf32> -> vector<8x128xf32>
    %58 = arith.addf %56, %57 : vector<8x128xf32>
    %59 = arith.mulf %58, %15 : vector<8x128xf32>
    %60 = math.tanh %59 : vector<8x128xf32>
    %61 = arith.mulf %60, %15 : vector<8x128xf32>
    %62 = arith.addf %61, %18 : vector<8x128xf32>
    %63 = vector.extract_strided_slice %62 {offsets = [0, 0], sizes = [8, 32], strides = [1, 1]} : vector<8x128xf32> to vector<8x32xf32>
    %64 = vector.extract_strided_slice %62 {offsets = [0, 32], sizes = [8, 32], strides = [1, 1]} : vector<8x128xf32> to vector<8x32xf32>
    %65 = vector.extract_strided_slice %62 {offsets = [0, 64], sizes = [8, 32], strides = [1, 1]} : vector<8x128xf32> to vector<8x32xf32>
    %66 = vector.extract_strided_slice %62 {offsets = [0, 96], sizes = [8, 32], strides = [1, 1]} : vector<8x128xf32> to vector<8x32xf32>
    %67 = arith.mulf %64, %52 : vector<8x32xf32>
    %68 = arith.mulf %63, %65 : vector<8x32xf32>
    %69 = arith.addf %67, %68 : vector<8x32xf32>
    %70 = math.tanh %69 : vector<8x32xf32>
    %71 = arith.mulf %66, %70 : vector<8x32xf32>
    %c16 = arith.constant 16 : index
    %c0_20 = arith.constant 0 : index
    %72 = vector.load %arg7[%c16, %c0_20] : memref<64x32xf32, #tpu.memory_space<vmem>>, vector<8x32xf32>
    tpu.vector_store %arg7[%c16, %c0_20], %71 {strides = array<i32>} : memref<64x32xf32, #tpu.memory_space<vmem>>, vector<8x32xf32>,
    %73 = vector.extract_strided_slice %6 {offsets = [24, 0], sizes = [8, 128], strides = [1, 1]} : vector<64x128xf32> to vector<8x128xf32>
    %cst_21 = arith.constant dense<0.000000e+00> : vector<8x128xf32>
    %74 = tpu.matmul %71, %19, %cst_21 {dimension_numbers = #tpu.dot_dimension_numbers<[1], [0], [0], [1], [0, 0, 1, 1], [], []>} : vector<8x32xf32>, vector<32x128xf32>, vector<8x128xf32> -> vector<8x128xf32>
    %75 = arith.addf %73, %74 : vector<8x128xf32>
    %76 = arith.mulf %75, %15 : vector<8x128xf32>
    %77 = math.tanh %76 : vector<8x128xf32>
    %78 = arith.mulf %77, %15 : vector<8x128xf32>
    %79 = arith.addf %78, %18 : vector<8x128xf32>
    %80 = vector.extract_strided_slice %79 {offsets = [0, 0], sizes = [8, 32], strides = [1, 1]} : vector<8x128xf32> to vector<8x32xf32>
    %81 = vector.extract_strided_slice %79 {offsets = [0, 32], sizes = [8, 32], strides = [1, 1]} : vector<8x128xf32> to vector<8x32xf32>
    %82 = vector.extract_strided_slice %79 {offsets = [0, 64], sizes = [8, 32], strides = [1, 1]} : vector<8x128xf32> to vector<8x32xf32>
    %83 = vector.extract_strided_slice %79 {offsets = [0, 96], sizes = [8, 32], strides = [1, 1]} : vector<8x128xf32> to vector<8x32xf32>
    %84 = arith.mulf %81, %69 : vector<8x32xf32>
    %85 = arith.mulf %80, %82 : vector<8x32xf32>
    %86 = arith.addf %84, %85 : vector<8x32xf32>
    %87 = math.tanh %86 : vector<8x32xf32>
    %88 = arith.mulf %83, %87 : vector<8x32xf32>
    %c24 = arith.constant 24 : index
    %c0_22 = arith.constant 0 : index
    %89 = vector.load %arg7[%c24, %c0_22] : memref<64x32xf32, #tpu.memory_space<vmem>>, vector<8x32xf32>
    tpu.vector_store %arg7[%c24, %c0_22], %88 {strides = array<i32>} : memref<64x32xf32, #tpu.memory_space<vmem>>, vector<8x32xf32>,
    %90 = vector.extract_strided_slice %6 {offsets = [32, 0], sizes = [8, 128], strides = [1, 1]} : vector<64x128xf32> to vector<8x128xf32>
    %cst_23 = arith.constant dense<0.000000e+00> : vector<8x128xf32>
    %91 = tpu.matmul %88, %19, %cst_23 {dimension_numbers = #tpu.dot_dimension_numbers<[1], [0], [0], [1], [0, 0, 1, 1], [], []>} : vector<8x32xf32>, vector<32x128xf32>, vector<8x128xf32> -> vector<8x128xf32>
    %92 = arith.addf %90, %91 : vector<8x128xf32>
    %93 = arith.mulf %92, %15 : vector<8x128xf32>
    %94 = math.tanh %93 : vector<8x128xf32>
    %95 = arith.mulf %94, %15 : vector<8x128xf32>
    %96 = arith.addf %95, %18 : vector<8x128xf32>
    %97 = vector.extract_strided_slice %96 {offsets = [0, 0], sizes = [8, 32], strides = [1, 1]} : vector<8x128xf32> to vector<8x32xf32>
    %98 = vector.extract_strided_slice %96 {offsets = [0, 32], sizes = [8, 32], strides = [1, 1]} : vector<8x128xf32> to vector<8x32xf32>
    %99 = vector.extract_strided_slice %96 {offsets = [0, 64], sizes = [8, 32], strides = [1, 1]} : vector<8x128xf32> to vector<8x32xf32>
    %100 = vector.extract_strided_slice %96 {offsets = [0, 96], sizes = [8, 32], strides = [1, 1]} : vector<8x128xf32> to vector<8x32xf32>
    %101 = arith.mulf %98, %86 : vector<8x32xf32>
    %102 = arith.mulf %97, %99 : vector<8x32xf32>
    %103 = arith.addf %101, %102 : vector<8x32xf32>
    %104 = math.tanh %103 : vector<8x32xf32>
    %105 = arith.mulf %100, %104 : vector<8x32xf32>
    %c32 = arith.constant 32 : index
    %c0_24 = arith.constant 0 : index
    %106 = vector.load %arg7[%c32, %c0_24] : memref<64x32xf32, #tpu.memory_space<vmem>>, vector<8x32xf32>
    tpu.vector_store %arg7[%c32, %c0_24], %105 {strides = array<i32>} : memref<64x32xf32, #tpu.memory_space<vmem>>, vector<8x32xf32>,
    %107 = vector.extract_strided_slice %6 {offsets = [40, 0], sizes = [8, 128], strides = [1, 1]} : vector<64x128xf32> to vector<8x128xf32>
    %cst_25 = arith.constant dense<0.000000e+00> : vector<8x128xf32>
    %108 = tpu.matmul %105, %19, %cst_25 {dimension_numbers = #tpu.dot_dimension_numbers<[1], [0], [0], [1], [0, 0, 1, 1], [], []>} : vector<8x32xf32>, vector<32x128xf32>, vector<8x128xf32> -> vector<8x128xf32>
    %109 = arith.addf %107, %108 : vector<8x128xf32>
    %110 = arith.mulf %109, %15 : vector<8x128xf32>
    %111 = math.tanh %110 : vector<8x128xf32>
    %112 = arith.mulf %111, %15 : vector<8x128xf32>
    %113 = arith.addf %112, %18 : vector<8x128xf32>
    %114 = vector.extract_strided_slice %113 {offsets = [0, 0], sizes = [8, 32], strides = [1, 1]} : vector<8x128xf32> to vector<8x32xf32>
    %115 = vector.extract_strided_slice %113 {offsets = [0, 32], sizes = [8, 32], strides = [1, 1]} : vector<8x128xf32> to vector<8x32xf32>
    %116 = vector.extract_strided_slice %113 {offsets = [0, 64], sizes = [8, 32], strides = [1, 1]} : vector<8x128xf32> to vector<8x32xf32>
    %117 = vector.extract_strided_slice %113 {offsets = [0, 96], sizes = [8, 32], strides = [1, 1]} : vector<8x128xf32> to vector<8x32xf32>
    %118 = arith.mulf %115, %103 : vector<8x32xf32>
    %119 = arith.mulf %114, %116 : vector<8x32xf32>
    %120 = arith.addf %118, %119 : vector<8x32xf32>
    %121 = math.tanh %120 : vector<8x32xf32>
    %122 = arith.mulf %117, %121 : vector<8x32xf32>
    %c40 = arith.constant 40 : index
    %c0_26 = arith.constant 0 : index
    %123 = vector.load %arg7[%c40, %c0_26] : memref<64x32xf32, #tpu.memory_space<vmem>>, vector<8x32xf32>
    tpu.vector_store %arg7[%c40, %c0_26], %122 {strides = array<i32>} : memref<64x32xf32, #tpu.memory_space<vmem>>, vector<8x32xf32>,
    %124 = vector.extract_strided_slice %6 {offsets = [48, 0], sizes = [8, 128], strides = [1, 1]} : vector<64x128xf32> to vector<8x128xf32>
    %cst_27 = arith.constant dense<0.000000e+00> : vector<8x128xf32>
    %125 = tpu.matmul %122, %19, %cst_27 {dimension_numbers = #tpu.dot_dimension_numbers<[1], [0], [0], [1], [0, 0, 1, 1], [], []>} : vector<8x32xf32>, vector<32x128xf32>, vector<8x128xf32> -> vector<8x128xf32>
    %126 = arith.addf %124, %125 : vector<8x128xf32>
    %127 = arith.mulf %126, %15 : vector<8x128xf32>
    %128 = math.tanh %127 : vector<8x128xf32>
    %129 = arith.mulf %128, %15 : vector<8x128xf32>
    %130 = arith.addf %129, %18 : vector<8x128xf32>
    %131 = vector.extract_strided_slice %130 {offsets = [0, 0], sizes = [8, 32], strides = [1, 1]} : vector<8x128xf32> to vector<8x32xf32>
    %132 = vector.extract_strided_slice %130 {offsets = [0, 32], sizes = [8, 32], strides = [1, 1]} : vector<8x128xf32> to vector<8x32xf32>
    %133 = vector.extract_strided_slice %130 {offsets = [0, 64], sizes = [8, 32], strides = [1, 1]} : vector<8x128xf32> to vector<8x32xf32>
    %134 = vector.extract_strided_slice %130 {offsets = [0, 96], sizes = [8, 32], strides = [1, 1]} : vector<8x128xf32> to vector<8x32xf32>
    %135 = arith.mulf %132, %120 : vector<8x32xf32>
    %136 = arith.mulf %131, %133 : vector<8x32xf32>
    %137 = arith.addf %135, %136 : vector<8x32xf32>
    %138 = math.tanh %137 : vector<8x32xf32>
    %139 = arith.mulf %134, %138 : vector<8x32xf32>
    %c48 = arith.constant 48 : index
    %c0_28 = arith.constant 0 : index
    %140 = vector.load %arg7[%c48, %c0_28] : memref<64x32xf32, #tpu.memory_space<vmem>>, vector<8x32xf32>
    tpu.vector_store %arg7[%c48, %c0_28], %139 {strides = array<i32>} : memref<64x32xf32, #tpu.memory_space<vmem>>, vector<8x32xf32>,
    %141 = vector.extract_strided_slice %6 {offsets = [56, 0], sizes = [8, 128], strides = [1, 1]} : vector<64x128xf32> to vector<8x128xf32>
    %cst_29 = arith.constant dense<0.000000e+00> : vector<8x128xf32>
    %142 = tpu.matmul %139, %19, %cst_29 {dimension_numbers = #tpu.dot_dimension_numbers<[1], [0], [0], [1], [0, 0, 1, 1], [], []>} : vector<8x32xf32>, vector<32x128xf32>, vector<8x128xf32> -> vector<8x128xf32>
    %143 = arith.addf %141, %142 : vector<8x128xf32>
    %144 = arith.mulf %143, %15 : vector<8x128xf32>
    %145 = math.tanh %144 : vector<8x128xf32>
    %146 = arith.mulf %145, %15 : vector<8x128xf32>
    %147 = arith.addf %146, %18 : vector<8x128xf32>
    %148 = vector.extract_strided_slice %147 {offsets = [0, 0], sizes = [8, 32], strides = [1, 1]} : vector<8x128xf32> to vector<8x32xf32>
    %149 = vector.extract_strided_slice %147 {offsets = [0, 32], sizes = [8, 32], strides = [1, 1]} : vector<8x128xf32> to vector<8x32xf32>
    %150 = vector.extract_strided_slice %147 {offsets = [0, 64], sizes = [8, 32], strides = [1, 1]} : vector<8x128xf32> to vector<8x32xf32>
    %151 = vector.extract_strided_slice %147 {offsets = [0, 96], sizes = [8, 32], strides = [1, 1]} : vector<8x128xf32> to vector<8x32xf32>
    %152 = arith.mulf %149, %137 : vector<8x32xf32>
    %153 = arith.mulf %148, %150 : vector<8x32xf32>
    %154 = arith.addf %152, %153 : vector<8x32xf32>
    %155 = math.tanh %154 : vector<8x32xf32>
    %156 = arith.mulf %151, %155 : vector<8x32xf32>
    %c56 = arith.constant 56 : index
    %c0_30 = arith.constant 0 : index
    %157 = vector.load %arg7[%c56, %c0_30] : memref<64x32xf32, #tpu.memory_space<vmem>>, vector<8x32xf32>
    tpu.vector_store %arg7[%c56, %c0_30], %156 {strides = array<i32>} : memref<64x32xf32, #tpu.memory_space<vmem>>, vector<8x32xf32>,
    %cst_31 = arith.constant 0.000000e+00 : f32
    %158 = vector.broadcast %cst_31 : f32 to vector<48x128xf32>
    %c0_32 = arith.constant 0 : index
    %c0_33 = arith.constant 0 : index
    %159 = vector.load %arg7[%c0_32, %c0_33] : memref<64x32xf32, #tpu.memory_space<vmem>>, vector<48x32xf32>
    %c0_34 = arith.constant 0 : index
    %c0_35 = arith.constant 0 : index
    %160 = vector.load %arg5[%c0_34, %c0_35] : memref<96x128xf32, #tpu.memory_space<vmem>>, vector<32x128xf32>
    %cst_36 = arith.constant dense<0.000000e+00> : vector<48x128xf32>
    %161 = tpu.matmul %159, %160, %cst_36 {dimension_numbers = #tpu.dot_dimension_numbers<[1], [0], [0], [1], [0, 0, 1, 1], [], []>} : vector<48x32xf32>, vector<32x128xf32>, vector<48x128xf32> -> vector<48x128xf32>
    %162 = arith.addf %158, %161 : vector<48x128xf32>
    %c8_37 = arith.constant 8 : index
    %c0_38 = arith.constant 0 : index
    %163 = vector.load %arg7[%c8_37, %c0_38] : memref<64x32xf32, #tpu.memory_space<vmem>>, vector<48x32xf32>
    %c32_39 = arith.constant 32 : index
    %c0_40 = arith.constant 0 : index
    %164 = vector.load %arg5[%c32_39, %c0_40] : memref<96x128xf32, #tpu.memory_space<vmem>>, vector<32x128xf32>
    %cst_41 = arith.constant dense<0.000000e+00> : vector<48x128xf32>
    %165 = tpu.matmul %163, %164, %cst_41 {dimension_numbers = #tpu.dot_dimension_numbers<[1], [0], [0], [1], [0, 0, 1, 1], [], []>} : vector<48x32xf32>, vector<32x128xf32>, vector<48x128xf32> -> vector<48x128xf32>
    %166 = arith.addf %162, %165 : vector<48x128xf32>
    %c16_42 = arith.constant 16 : index
    %c0_43 = arith.constant 0 : index
    %167 = vector.load %arg7[%c16_42, %c0_43] : memref<64x32xf32, #tpu.memory_space<vmem>>, vector<48x32xf32>
    %c64 = arith.constant 64 : index
    %c0_44 = arith.constant 0 : index
    %168 = vector.load %arg5[%c64, %c0_44] : memref<96x128xf32, #tpu.memory_space<vmem>>, vector<32x128xf32>
    %cst_45 = arith.constant dense<0.000000e+00> : vector<48x128xf32>
    %169 = tpu.matmul %167, %168, %cst_45 {dimension_numbers = #tpu.dot_dimension_numbers<[1], [0], [0], [1], [0, 0, 1, 1], [], []>} : vector<48x32xf32>, vector<32x128xf32>, vector<48x128xf32> -> vector<48x128xf32>
    %170 = arith.addf %166, %169 : vector<48x128xf32>
    %171 = vector.shape_cast %170 : vector<48x128xf32> to vector<6x8x128xf32>
    %c0_46 = arith.constant 0 : index
    %c0_47 = arith.constant 0 : index
    %c0_48 = arith.constant 0 : index
    %172 = vector.load %arg6[%c0_46, %c0_47, %c0_48] : memref<6x8x128xf32, #tpu.memory_space<vmem>>, vector<6x8x128xf32>
    tpu.vector_store %arg6[%c0_46, %c0_47, %c0_48], %171 {strides = array<i32>} : memref<6x8x128xf32, #tpu.memory_space<vmem>>, vector<6x8x128xf32>,
    return
  }
  func.func @transform_0(%arg0: i32) -> (i32, i32, i32) {
    %c0_i32 = arith.constant 0 : i32
    %c0_i32_0 = arith.constant 0 : i32
    %c0_i32_1 = arith.constant 0 : i32
    return %c0_i32, %arg0, %c0_i32_0 : i32, i32, i32
  }
  func.func @transform_1(%arg0: i32) -> (i32, i32) {
    %c0_i32 = arith.constant 0 : i32
    %c0_i32_0 = arith.constant 0 : i32
    %c0_i32_1 = arith.constant 0 : i32
    return %c0_i32, %c0_i32_0 : i32, i32
  }
  func.func @transform_2(%arg0: i32) -> (i32, i32) {
    %c0_i32 = arith.constant 0 : i32
    %c0_i32_0 = arith.constant 0 : i32
    %c0_i32_1 = arith.constant 0 : i32
    return %c0_i32, %c0_i32_0 : i32, i32
  }
  func.func @transform_3(%arg0: i32) -> (i32, i32) {
    %c0_i32 = arith.constant 0 : i32
    %c0_i32_0 = arith.constant 0 : i32
    %c0_i32_1 = arith.constant 0 : i32
    return %c0_i32, %c0_i32_0 : i32, i32
  }
  func.func @transform_4(%arg0: i32) -> (i32, i32) {
    %c0_i32 = arith.constant 0 : i32
    %c0_i32_0 = arith.constant 0 : i32
    %c0_i32_1 = arith.constant 0 : i32
    return %c0_i32, %c0_i32_0 : i32, i32
  }
  func.func @transform_5(%arg0: i32) -> (i32, i32, i32) {
    %c0_i32 = arith.constant 0 : i32
    %c0_i32_0 = arith.constant 0 : i32
    %c0_i32_1 = arith.constant 0 : i32
    return %c0_i32, %arg0, %c0_i32_0 : i32, i32, i32
  }
}

</mosaic_0001>

<llo_original>
// kernel: auvi_subnet_forward.1
$region0: #{auvi_subnet_forward.1}
  #allocation0 [shape = 'u32[]', space=smem, size = 0x4, offset = 0x4, fixed_abs, tag = 'smem constant byte address 0x4 - core index']
  #allocation1 [shape = 'u32[144,128]{1,0:T(1,128)}', space=vmem, size = 0x12000, scoped, tag = 'internal scratch']
  #allocation2 [shape = 'f32[64,32]{1,0:T(8,128)}', space=vmem, size = 0x8000, scoped, tag = 'scratch operand']
  %s0 = inlined_call_operand.vmem [shape: f32[8,8,20], index: 0, kind: input, shape index: {}]
  %s1 = inlined_call_operand.vmem [shape: f32[20,128], index: 1, kind: input, shape index: {}]
  %s2 = inlined_call_operand.vmem [shape: f32[32,128], index: 2, kind: input, shape index: {}]
  %s3 = inlined_call_operand.vmem [shape: f32[1,128], index: 3, kind: input, shape index: {}]
  %s4 = inlined_call_operand.vmem [shape: f32[96,128], index: 4, kind: input, shape index: {}]
  %s5 = inlined_call_operand.vmem [shape: f32[6,8,128], index: 5, kind: output, shape index: {}]
  %s6 = sld [smem:[#allocation0]]
  $region30: #{auvi_subnet_forward.1} parent=0
    _
  %s8 = ssub.s32 1, %s6
  %s9 = scalar_select 0, %s8, %s6
  // Predicated region
  $region2: #{auvi_subnet_forward.1} parent=0 // pred_check
    _
  $region3: #{auvi_subnet_forward.1} parent=0 // pred_check_branch
    %11 = sbr.rel (0) target = $region5
  $region4: #{auvi_subnet_forward.1} parent=0 // pred_region
    _
  $region5: #{auvi_subnet_forward.1} parent=0 // pred_fallthru
    _
  // Predicated region
  $region6: #{auvi_subnet_forward.1} parent=0 // pred_check
    _
  $region7: #{auvi_subnet_forward.1} parent=0 // pred_check_branch
    %13 = sbr.rel (0) target = $region9
  $region8: #{auvi_subnet_forward.1} parent=0 // pred_region
    _
  $region9: #{auvi_subnet_forward.1} parent=0 // pred_fallthru
    _
  // Predicated region
  $region10: #{auvi_subnet_forward.1} parent=0 // pred_check
    _
  $region11: #{auvi_subnet_forward.1} parent=0 // pred_check_branch
    %15 = sbr.rel (0) target = $region13
  $region12: #{auvi_subnet_forward.1} parent=0 // pred_region
    _
  $region13: #{auvi_subnet_forward.1} parent=0 // pred_fallthru
    _
  // Predicated region
  $region14: #{auvi_subnet_forward.1} parent=0 // pred_check
    _
  $region15: #{auvi_subnet_forward.1} parent=0 // pred_check_branch
    %17 = sbr.rel (0) target = $region17
  $region16: #{auvi_subnet_forward.1} parent=0 // pred_region
    _
  $region17: #{auvi_subnet_forward.1} parent=0 // pred_fallthru
    _
  // Predicated region
  $region18: #{auvi_subnet_forward.1} parent=0 // pred_check
    _
  $region19: #{auvi_subnet_forward.1} parent=0 // pred_check_branch
    %19 = sbr.rel (0) target = $region21
  $region20: #{auvi_subnet_forward.1} parent=0 // pred_region
    _
  $region21: #{auvi_subnet_forward.1} parent=0 // pred_fallthru
    _
  %v20 = vld [vmem:[%s0] sm:$0xff]
  %v21 = vld [vmem:[%s0 + $0x8] sm:$0xff]
  %v22 = vld [vmem:[%s0 + $0x10] sm:$0xff]
  %v23 = vld [vmem:[%s0 + $0x18] sm:$0xff]
  %v24 = vld [vmem:[%s0 + $0x20] sm:$0xff]
  %v25 = vld [vmem:[%s0 + $0x28] sm:$0xff]
  %v26 = vld [vmem:[%s0 + $0x30] sm:$0xff]
  %v27 = vld [vmem:[%s0 + $0x38] sm:$0xff]
  %v28 = vld [vmem:[%s1] sm:$0xff]
  %v29 = vld [vmem:[%s1 + $0x8] sm:$0xff]
  %v30 = vld [vmem:[%s1 + $0x10] sm:$0xf]
  %v31 = vld [vmem:[%s3] sm:$0x1]
  %v33 = vlaneseq
  %v34 = vshrl.u32 %v33, 7
  %v35 = vsub.s32 0, %v34
  %v36 = vrot.slane %v31, %v35
  %vm38 = vcmask 162816
  %v40 = vsel %vm38, %v20, 0
  %v43 = vsel %vm38, %v21, 0
  %v46 = vsel %vm38, %v22, 0
  %v49 = vsel %vm38, %v23, 0
  %v52 = vsel %vm38, %v24, 0
  %v55 = vsel %vm38, %v25, 0
  %v58 = vsel %vm38, %v26, 0
  %v61 = vsel %vm38, %v27, 0
  %vm63 = vcmask 1043456
  %v65 = vsel %vm63, %v30, 0
  %67 = vmatprep.subr.mxu0 0.0
  %68 = vmatpush1.msra.mxu0 0.0
  %69 = vmatprep.subr.mxu0 0.0
  %70 = vmatpush1.msra.mxu0 0.0
  %71 = vmatprep.subr.mxu0 0.0
  %72 = vmatpush1.msra.mxu0 0.0
  %73 = vmatprep.subr.mxu0 0.0
  %74 = vmatpush1.msra.mxu0 0.0
  %75 = vmatprep.subr.mxu0 0.0
  %76 = vmatpush1.msra.mxu0 0.0
  %77 = vmatprep.subr.mxu0 0.0
  %78 = vmatpush1.msra.mxu0 0.0
  %79 = vmatprep.subr.mxu0 0.0
  %80 = vmatpush1.msra.mxu0 0.0
  %81 = vmatprep.subr.mxu0 0.0
  %82 = vmatpush1.msra.mxu0 0.0
  %83 = vmatprep.subr.mxu0 0.0
  %84 = vmatpush1.msra.mxu0 0.0
  %85 = vmatprep.subr.mxu0 0.0
  %86 = vmatpush1.msra.mxu0 0.0
  %87 = vmatprep.subr.mxu0 0.0
  %88 = vmatpush1.msra.mxu0 0.0
  %89 = vmatprep.subr.mxu0 0.0
  %90 = vmatpush1.msra.mxu0 0.0
  %91 = vmatprep.subr.mxu0 0.0
  %92 = vmatpush1.msra.mxu0 0.0
  %93 = vmatprep.subr.mxu0 0.0
  %94 = vmatpush1.msra.mxu0 %v65
  %95 = vmatprep.subr.mxu0 0.0
  %96 = vmatpush1.msra.mxu0 %v29
  %97 = vmatprep.subr.mxu0 0.0
  %98 = vmatpush1.msra.mxu0 %v28
  %99 = vmatprep.subr.mxu0 0.0
  %100 = vmatpush2.msra.mxu0 0.0
  %101 = vmatprep.subr.mxu0 0.0
  %102 = vmatpush2.msra.mxu0 0.0
  %103 = vmatprep.subr.mxu0 0.0
  %104 = vmatpush2.msra.mxu0 0.0
  %105 = vmatprep.subr.mxu0 0.0
  %106 = vmatpush2.msra.mxu0 0.0
  %107 = vmatprep.subr.mxu0 0.0
  %108 = vmatpush2.msra.mxu0 0.0
  %109 = vmatprep.subr.mxu0 0.0
  %110 = vmatpush2.msra.mxu0 0.0
  %111 = vmatprep.subr.mxu0 0.0
  %112 = vmatpush2.msra.mxu0 0.0
  %113 = vmatprep.subr.mxu0 0.0
  %114 = vmatpush2.msra.mxu0 0.0
  %115 = vmatprep.subr.mxu0 0.0
  %116 = vmatpush2.msra.mxu0 0.0
  %117 = vmatprep.subr.mxu0 0.0
  %118 = vmatpush2.msra.mxu0 0.0
  %119 = vmatprep.subr.mxu0 0.0
  %120 = vmatpush2.msra.mxu0 0.0
  %121 = vmatprep.subr.mxu0 0.0
  %122 = vmatpush2.msra.mxu0 0.0
  %123 = vmatprep.subr.mxu0 0.0
  %124 = vmatpush2.msra.mxu0 0.0
  %125 = vmatprep.subr.mxu0 0.0
  %126 = vmatpush2.msra.mxu0 0.0
  %127 = vmatprep.subr.mxu0 0.0
  %128 = vmatpush2.msra.mxu0 0.0
  %129 = vmatprep.subr.mxu0 0.0
  %130 = vmatpush2.msra.mxu0 0.0
  %131 = vmatprep.mubr.f32.mxu0 0.0
  %132 = vmatmul.mubr.f32.gmra.mxu0 %v40
  %v133 = vpop.f32.mrf.mxu0
  %v134 = vadd.f32 %v36, %v133
  %v135 = vpop.f32.mrf.mxu0
  %136 = vmatprep.mubr.f32.mxu0 0.0
  %137 = vmatmul.mubr.f32.gmra.mxu0 %v43
  %v138 = vpop.f32.mrf.mxu0
  %v139 = vadd.f32 %v36, %v138
  %v140 = vpop.f32.mrf.mxu0
  %141 = vmatprep.mubr.f32.mxu0 0.0
  %142 = vmatmul.mubr.f32.gmra.mxu0 %v46
  %v143 = vpop.f32.mrf.mxu0
  %v144 = vadd.f32 %v36, %v143
  %v145 = vpop.f32.mrf.mxu0
  %146 = vmatprep.mubr.f32.mxu0 0.0
  %147 = vmatmul.mubr.f32.gmra.mxu0 %v49
  %v148 = vpop.f32.mrf.mxu0
  %v149 = vadd.f32 %v36, %v148
  %v150 = vpop.f32.mrf.mxu0
  %151 = vmatprep.mubr.f32.mxu0 0.0
  %152 = vmatmul.mubr.f32.gmra.mxu0 %v52
  %v153 = vpop.f32.mrf.mxu0
  %v154 = vadd.f32 %v36, %v153
  %v155 = vpop.f32.mrf.mxu0
  %156 = vmatprep.mubr.f32.mxu0 0.0
  %157 = vmatmul.mubr.f32.gmra.mxu0 %v55
  %v158 = vpop.f32.mrf.mxu0
  %v159 = vadd.f32 %v36, %v158
  %v160 = vpop.f32.mrf.mxu0
  %161 = vmatprep.mubr.f32.mxu0 0.0
  %162 = vmatmul.mubr.f32.gmra.mxu0 %v58
  %v163 = vpop.f32.mrf.mxu0
  %v164 = vadd.f32 %v36, %v163
  %v165 = vpop.f32.mrf.mxu0
  %166 = vmatprep.mubr.f32.mxu0 0.0
  %167 = vmatmul.mubr.f32.gmra.mxu0 %v61
  %v168 = vpop.f32.mrf.mxu0
  %v169 = vadd.f32 %v36, %v168
  %v170 = vpop.f32.mrf.mxu0
  %171 = vdwg.mxu0
  %v172 = vlaneseq
  %v173 = vand.u32 %v172, 127
  %vm174 = vcmp.ge.s32.totalorder %v173, 64
  %vm175 = vcmp.lt.s32.totalorder %v173, 96
  %vm176 = vmand %vm174, %vm175
  %v177 = vsel %vm176, 1.0, 0.5
  %v178 = vsel %vm176, 0.0, 0.5
  %v179 = vld [vmem:[%s2] sm:$0xff]
  %v180 = vld [vmem:[%s2 + $0x8] sm:$0xff]
  %v181 = vld [vmem:[%s2 + $0x10] sm:$0xff]
  %v182 = vld [vmem:[%s2 + $0x18] sm:$0xff]
  %vm183 = vcmask 261120
  %v185 = vsel %vm183, 0.0, 0
  %187 = vmatprep.subr.mxu0 0.0
  %188 = vmatpush1.msra.mxu0 0.0
  %189 = vmatprep.subr.mxu0 0.0
  %190 = vmatpush1.msra.mxu0 0.0
  %191 = vmatprep.subr.mxu0 0.0
  %192 = vmatpush1.msra.mxu0 0.0
  %193 = vmatprep.subr.mxu0 0.0
  %194 = vmatpush1.msra.mxu0 0.0
  %195 = vmatprep.subr.mxu0 0.0
  %196 = vmatpush1.msra.mxu0 0.0
  %197 = vmatprep.subr.mxu0 0.0
  %198 = vmatpush1.msra.mxu0 0.0
  %199 = vmatprep.subr.mxu0 0.0
  %200 = vmatpush1.msra.mxu0 0.0
  %201 = vmatprep.subr.mxu0 0.0
  %202 = vmatpush1.msra.mxu0 0.0
  %203 = vmatprep.subr.mxu0 0.0
  %204 = vmatpush1.msra.mxu0 0.0
  %205 = vmatprep.subr.mxu0 0.0
  %206 = vmatpush1.msra.mxu0 0.0
  %207 = vmatprep.subr.mxu0 0.0
  %208 = vmatpush1.msra.mxu0 0.0
  %209 = vmatprep.subr.mxu0 0.0
  %210 = vmatpush1.msra.mxu0 0.0
  %211 = vmatprep.subr.mxu0 0.0
  %212 = vmatpush1.msra.mxu0 %v182
  %213 = vmatprep.subr.mxu0 0.0
  %214 = vmatpush1.msra.mxu0 %v181
  %215 = vmatprep.subr.mxu0 0.0
  %216 = vmatpush1.msra.mxu0 %v180
  %217 = vmatprep.subr.mxu0 0.0
  %218 = vmatpush1.msra.mxu0 %v179
  %219 = vmatprep.subr.mxu0 0.0
  %220 = vmatpush2.msra.mxu0 0.0
  %221 = vmatprep.subr.mxu0 0.0
  %222 = vmatpush2.msra.mxu0 0.0
  %223 = vmatprep.subr.mxu0 0.0
  %224 = vmatpush2.msra.mxu0 0.0
  %225 = vmatprep.subr.mxu0 0.0
  %226 = vmatpush2.msra.mxu0 0.0
  %227 = vmatprep.subr.mxu0 0.0
  %228 = vmatpush2.msra.mxu0 0.0
  %229 = vmatprep.subr.mxu0 0.0
  %230 = vmatpush2.msra.mxu0 0.0
  %231 = vmatprep.subr.mxu0 0.0
  %232 = vmatpush2.msra.mxu0 0.0
  %233 = vmatprep.subr.mxu0 0.0
  %234 = vmatpush2.msra.mxu0 0.0
  %235 = vmatprep.subr.mxu0 0.0
  %236 = vmatpush2.msra.mxu0 0.0
  %237 = vmatprep.subr.mxu0 0.0
  %238 = vmatpush2.msra.mxu0 0.0
  %239 = vmatprep.subr.mxu0 0.0
  %240 = vmatpush2.msra.mxu0 0.0
  %241 = vmatprep.subr.mxu0 0.0
  %242 = vmatpush2.msra.mxu0 0.0
  %243 = vmatprep.subr.mxu0 0.0
  %244 = vmatpush2.msra.mxu0 0.0
  %245 = vmatprep.subr.mxu0 0.0
  %246 = vmatpush2.msra.mxu0 0.0
  %247 = vmatprep.subr.mxu0 0.0
  %248 = vmatpush2.msra.mxu0 0.0
  %249 = vmatprep.subr.mxu0 0.0
  %250 = vmatpush2.msra.mxu0 0.0
  %251 = vmatprep.mubr.f32.mxu0 0.0
  %252 = vmatmul.mubr.f32.gmra.mxu0 %v185
  %v253 = vpop.f32.mrf.mxu0
  %v254 = vadd.f32 0.0, %v253
  %v255 = vpop.f32.mrf.mxu0
  %256 = vdwg.mxu0
  %v257 = vadd.f32 %v134, %v254
  %v258 = vmul.f32 %v257, %v177
  %v259 = vtanh.pop %v258
  %v260 = vmul.f32 %v259, %v177
  %v261 = vadd.f32 %v260, %v178
  %v262 = vmul.f32 %v261, 0.0
  %264 = vrot.lane.b32.xlu0 %v261, 64
  %v265 = vpop.permute.xlu0 %264
  %v267 = vmul.f32 %v261, %v265
  %269 = vrot.lane.b32.xlu0 %v267, 32
  %v270 = vpop.permute.xlu0 %269
  %v272 = vadd.f32 %v262, %v270
  %v273 = vtanh.pop %v272
  %275 = vrot.lane.b32.xlu0 %v273, 64
  %v276 = vpop.permute.xlu0 %275
  %v278 = vmul.f32 %v261, %v276
  %280 = vrot.lane.b32.xlu0 %v278, 32
  %v281 = vpop.permute.xlu0 %280
  %283 = vst.msk [vmem:[#allocation2] sm:$0xff] %vm183, %v281
  %v284 = vsel %vm183, %v281, 0
  %286 = vmatprep.subr.mxu0 0.0
  %287 = vmatpush1.msra.mxu0 0.0
  %288 = vmatprep.subr.mxu0 0.0
  %289 = vmatpush1.msra.mxu0 0.0
  %290 = vmatprep.subr.mxu0 0.0
  %291 = vmatpush1.msra.mxu0 0.0
  %292 = vmatprep.subr.mxu0 0.0
  %293 = vmatpush1.msra.mxu0 0.0
  %294 = vmatprep.subr.mxu0 0.0
  %295 = vmatpush1.msra.mxu0 0.0
  %296 = vmatprep.subr.mxu0 0.0
  %297 = vmatpush1.msra.mxu0 0.0
  %298 = vmatprep.subr.mxu0 0.0
  %299 = vmatpush1.msra.mxu0 0.0
  %300 = vmatprep.subr.mxu0 0.0
  %301 = vmatpush1.msra.mxu0 0.0
  %302 = vmatprep.subr.mxu0 0.0
  %303 = vmatpush1.msra.mxu0 0.0
  %304 = vmatprep.subr.mxu0 0.0
  %305 = vmatpush1.msra.mxu0 0.0
  %306 = vmatprep.subr.mxu0 0.0
  %307 = vmatpush1.msra.mxu0 0.0
  %308 = vmatprep.subr.mxu0 0.0
  %309 = vmatpush1.msra.mxu0 0.0
  %310 = vmatprep.subr.mxu0 0.0
  %311 = vmatpush1.msra.mxu0 %v182
  %312 = vmatprep.subr.mxu0 0.0
  %313 = vmatpush1.msra.mxu0 %v181
  %314 = vmatprep.subr.mxu0 0.0
  %315 = vmatpush1.msra.mxu0 %v180
  %316 = vmatprep.subr.mxu0 0.0
  %317 = vmatpush1.msra.mxu0 %v179
  %318 = vmatprep.subr.mxu0 0.0
  %319 = vmatpush2.msra.mxu0 0.0
  %320 = vmatprep.subr.mxu0 0.0
  %321 = vmatpush2.msra.mxu0 0.0
  %322 = vmatprep.subr.mxu0 0.0
  %323 = vmatpush2.msra.mxu0 0.0
  %324 = vmatprep.subr.mxu0 0.0
  %325 = vmatpush2.msra.mxu0 0.0
  %326 = vmatprep.subr.mxu0 0.0
  %327 = vmatpush2.msra.mxu0 0.0
  %328 = vmatprep.subr.mxu0 0.0
  %329 = vmatpush2.msra.mxu0 0.0
  %330 = vmatprep.subr.mxu0 0.0
  %331 = vmatpush2.msra.mxu0 0.0
  %332 = vmatprep.subr.mxu0 0.0
  %333 = vmatpush2.msra.mxu0 0.0
  %334 = vmatprep.subr.mxu0 0.0
  %335 = vmatpush2.msra.mxu0 0.0
  %336 = vmatprep.subr.mxu0 0.0
  %337 = vmatpush2.msra.mxu0 0.0
  %338 = vmatprep.subr.mxu0 0.0
  %339 = vmatpush2.msra.mxu0 0.0
  %340 = vmatprep.subr.mxu0 0.0
  %341 = vmatpush2.msra.mxu0 0.0
  %342 = vmatprep.subr.mxu0 0.0
  %343 = vmatpush2.msra.mxu0 0.0
  %344 = vmatprep.subr.mxu0 0.0
  %345 = vmatpush2.msra.mxu0 0.0
  %346 = vmatprep.subr.mxu0 0.0
  %347 = vmatpush2.msra.mxu0 0.0
  %348 = vmatprep.subr.mxu0 0.0
  %349 = vmatpush2.msra.mxu0 0.0
  %350 = vmatprep.mubr.f32.mxu0 0.0
  %351 = vmatmul.mubr.f32.gmra.mxu0 %v284
  %v352 = vpop.f32.mrf.mxu0
  %v353 = vadd.f32 0.0, %v352
  %v354 = vpop.f32.mrf.mxu0
  %355 = vdwg.mxu0
  %v356 = vadd.f32 %v139, %v353
  %v357 = vmul.f32 %v356, %v177
  %v358 = vtanh.pop %v357
  %v359 = vmul.f32 %v358, %v177
  %v360 = vadd.f32 %v359, %v178
  %v361 = vmul.f32 %v360, %v272
  %363 = vrot.lane.b32.xlu0 %v360, 64
  %v364 = vpop.permute.xlu0 %363
  %v366 = vmul.f32 %v360, %v364
  %368 = vrot.lane.b32.xlu0 %v366, 32
  %v369 = vpop.permute.xlu0 %368
  %v371 = vadd.f32 %v361, %v369
  %v372 = vtanh.pop %v371
  %374 = vrot.lane.b32.xlu0 %v372, 64
  %v375 = vpop.permute.xlu0 %374
  %v377 = vmul.f32 %v360, %v375
  %379 = vrot.lane.b32.xlu0 %v377, 32
  %v380 = vpop.permute.xlu0 %379
  %382 = vst.msk [vmem:[#allocation2 + $0x8] sm:$0xff] %vm183, %v380
  %v383 = vsel %vm183, %v380, 0
  %385 = vmatprep.subr.mxu0 0.0
  %386 = vmatpush1.msra.mxu0 0.0
  %387 = vmatprep.subr.mxu0 0.0
  %388 = vmatpush1.msra.mxu0 0.0
  %389 = vmatprep.subr.mxu0 0.0
  %390 = vmatpush1.msra.mxu0 0.0
  %391 = vmatprep.subr.mxu0 0.0
  %392 = vmatpush1.msra.mxu0 0.0
  %393 = vmatprep.subr.mxu0 0.0
  %394 = vmatpush1.msra.mxu0 0.0
  %395 = vmatprep.subr.mxu0 0.0
  %396 = vmatpush1.msra.mxu0 0.0
  %397 = vmatprep.subr.mxu0 0.0
  %398 = vmatpush1.msra.mxu0 0.0
  %399 = vmatprep.subr.mxu0 0.0
  %400 = vmatpush1.msra.mxu0 0.0
  %401 = vmatprep.subr.mxu0 0.0
  %402 = vmatpush1.msra.mxu0 0.0
  %403 = vmatprep.subr.mxu0 0.0
  %404 = vmatpush1.msra.mxu0 0.0
  %405 = vmatprep.subr.mxu0 0.0
  %406 = vmatpush1.msra.mxu0 0.0
  %407 = vmatprep.subr.mxu0 0.0
  %408 = vmatpush1.msra.mxu0 0.0
  %409 = vmatprep.subr.mxu0 0.0
  %410 = vmatpush1.msra.mxu0 %v182
  %411 = vmatprep.subr.mxu0 0.0
  %412 = vmatpush1.msra.mxu0 %v181
  %413 = vmatprep.subr.mxu0 0.0
  %414 = vmatpush1.msra.mxu0 %v180
  %415 = vmatprep.subr.mxu0 0.0
  %416 = vmatpush1.msra.mxu0 %v179
  %417 = vmatprep.subr.mxu0 0.0
  %418 = vmatpush2.msra.mxu0 0.0
  %419 = vmatprep.subr.mxu0 0.0
  %420 = vmatpush2.msra.mxu0 0.0
  %421 = vmatprep.subr.mxu0 0.0
  %422 = vmatpush2.msra.mxu0 0.0
  %423 = vmatprep.subr.mxu0 0.0
  %424 = vmatpush2.msra.mxu0 0.0
  %425 = vmatprep.subr.mxu0 0.0
  %426 = vmatpush2.msra.mxu0 0.0
  %427 = vmatprep.subr.mxu0 0.0
  %428 = vmatpush2.msra.mxu0 0.0
  %429 = vmatprep.subr.mxu0 0.0
  %430 = vmatpush2.msra.mxu0 0.0
  %431 = vmatprep.subr.mxu0 0.0
  %432 = vmatpush2.msra.mxu0 0.0
  %433 = vmatprep.subr.mxu0 0.0
  %434 = vmatpush2.msra.mxu0 0.0
  %435 = vmatprep.subr.mxu0 0.0
  %436 = vmatpush2.msra.mxu0 0.0
  %437 = vmatprep.subr.mxu0 0.0
  %438 = vmatpush2.msra.mxu0 0.0
  %439 = vmatprep.subr.mxu0 0.0
  %440 = vmatpush2.msra.mxu0 0.0
  %441 = vmatprep.subr.mxu0 0.0
  %442 = vmatpush2.msra.mxu0 0.0
  %443 = vmatprep.subr.mxu0 0.0
  %444 = vmatpush2.msra.mxu0 0.0
  %445 = vmatprep.subr.mxu0 0.0
  %446 = vmatpush2.msra.mxu0 0.0
  %447 = vmatprep.subr.mxu0 0.0
  %448 = vmatpush2.msra.mxu0 0.0
  %449 = vmatprep.mubr.f32.mxu0 0.0
  %450 = vmatmul.mubr.f32.gmra.mxu0 %v383
  %v451 = vpop.f32.mrf.mxu0
  %v452 = vadd.f32 0.0, %v451
  %v453 = vpop.f32.mrf.mxu0
  %454 = vdwg.mxu0
  %v455 = vadd.f32 %v144, %v452
  %v456 = vmul.f32 %v455, %v177
  %v457 = vtanh.pop %v456
  %v458 = vmul.f32 %v457, %v177
  %v459 = vadd.f32 %v458, %v178
  %v460 = vmul.f32 %v459, %v371
  %462 = vrot.lane.b32.xlu0 %v459, 64
  %v463 = vpop.permute.xlu0 %462
  %v465 = vmul.f32 %v459, %v463
  %467 = vrot.lane.b32.xlu0 %v465, 32
  %v468 = vpop.permute.xlu0 %467
  %v470 = vadd.f32 %v460, %v468
  %v471 = vtanh.pop %v470
  %473 = vrot.lane.b32.xlu0 %v471, 64
  %v474 = vpop.permute.xlu0 %473
  %v476 = vmul.f32 %v459, %v474
  %478 = vrot.lane.b32.xlu0 %v476, 32
  %v479 = vpop.permute.xlu0 %478
  %481 = vst.msk [vmem:[#allocation2 + $0x10] sm:$0xff] %vm183, %v479
  %v482 = vsel %vm183, %v479, 0
  %484 = vmatprep.subr.mxu0 0.0
  %485 = vmatpush1.msra.mxu0 0.0
  %486 = vmatprep.subr.mxu0 0.0
  %487 = vmatpush1.msra.mxu0 0.0
  %488 = vmatprep.subr.mxu0 0.0
  %489 = vmatpush1.msra.mxu0 0.0
  %490 = vmatprep.subr.mxu0 0.0
  %491 = vmatpush1.msra.mxu0 0.0
  %492 = vmatprep.subr.mxu0 0.0
  %493 = vmatpush1.msra.mxu0 0.0
  %494 = vmatprep.subr.mxu0 0.0
  %495 = vmatpush1.msra.mxu0 0.0
  %496 = vmatprep.subr.mxu0 0.0
  %497 = vmatpush1.msra.mxu0 0.0
  %498 = vmatprep.subr.mxu0 0.0
  %499 = vmatpush1.msra.mxu0 0.0
  %500 = vmatprep.subr.mxu0 0.0
  %501 = vmatpush1.msra.mxu0 0.0
  %502 = vmatprep.subr.mxu0 0.0
  %503 = vmatpush1.msra.mxu0 0.0
  %504 = vmatprep.subr.mxu0 0.0
  %505 = vmatpush1.msra.mxu0 0.0
  %506 = vmatprep.subr.mxu0 0.0
  %507 = vmatpush1.msra.mxu0 0.0
  %508 = vmatprep.subr.mxu0 0.0
  %509 = vmatpush1.msra.mxu0 %v182
  %510 = vmatprep.subr.mxu0 0.0
  %511 = vmatpush1.msra.mxu0 %v181
  %512 = vmatprep.subr.mxu0 0.0
  %513 = vmatpush1.msra.mxu0 %v180
  %514 = vmatprep.subr.mxu0 0.0
  %515 = vmatpush1.msra.mxu0 %v179
  %516 = vmatprep.subr.mxu0 0.0
  %517 = vmatpush2.msra.mxu0 0.0
  %518 = vmatprep.subr.mxu0 0.0
  %519 = vmatpush2.msra.mxu0 0.0
  %520 = vmatprep.subr.mxu0 0.0
  %521 = vmatpush2.msra.mxu0 0.0
  %522 = vmatprep.subr.mxu0 0.0
  %523 = vmatpush2.msra.mxu0 0.0
  %524 = vmatprep.subr.mxu0 0.0
  %525 = vmatpush2.msra.mxu0 0.0
  %526 = vmatprep.subr.mxu0 0.0
  %527 = vmatpush2.msra.mxu0 0.0
  %528 = vmatprep.subr.mxu0 0.0
  %529 = vmatpush2.msra.mxu0 0.0
  %530 = vmatprep.subr.mxu0 0.0
  %531 = vmatpush2.msra.mxu0 0.0
  %532 = vmatprep.subr.mxu0 0.0
  %533 = vmatpush2.msra.mxu0 0.0
  %534 = vmatprep.subr.mxu0 0.0
  %535 = vmatpush2.msra.mxu0 0.0
  %536 = vmatprep.subr.mxu0 0.0
  %537 = vmatpush2.msra.mxu0 0.0
  %538 = vmatprep.subr.mxu0 0.0
  %539 = vmatpush2.msra.mxu0 0.0
  %540 = vmatprep.subr.mxu0 0.0
  %541 = vmatpush2.msra.mxu0 0.0
  %542 = vmatprep.subr.mxu0 0.0
  %543 = vmatpush2.msra.mxu0 0.0
  %544 = vmatprep.subr.mxu0 0.0
  %545 = vmatpush2.msra.mxu0 0.0
  %546 = vmatprep.subr.mxu0 0.0
  %547 = vmatpush2.msra.mxu0 0.0
  %548 = vmatprep.mubr.f32.mxu0 0.0
  %549 = vmatmul.mubr.f32.gmra.mxu0 %v482
  %v550 = vpop.f32.mrf.mxu0
  %v551 = vadd.f32 0.0, %v550
  %v552 = vpop.f32.mrf.mxu0
  %553 = vdwg.mxu0
  %v554 = vadd.f32 %v149, %v551
  %v555 = vmul.f32 %v554, %v177
  %v556 = vtanh.pop %v555
  %v557 = vmul.f32 %v556, %v177
  %v558 = vadd.f32 %v557, %v178
  %v559 = vmul.f32 %v558, %v470
  %561 = vrot.lane.b32.xlu0 %v558, 64
  %v562 = vpop.permute.xlu0 %561
  %v564 = vmul.f32 %v558, %v562
  %566 = vrot.lane.b32.xlu0 %v564, 32
  %v567 = vpop.permute.xlu0 %566
  %v569 = vadd.f32 %v559, %v567
  %v570 = vtanh.pop %v569
  %572 = vrot.lane.b32.xlu0 %v570, 64
  %v573 = vpop.permute.xlu0 %572
  %v575 = vmul.f32 %v558, %v573
  %577 = vrot.lane.b32.xlu0 %v575, 32
  %v578 = vpop.permute.xlu0 %577
  %580 = vst.msk [vmem:[#allocation2 + $0x18] sm:$0xff] %vm183, %v578
  %v581 = vsel %vm183, %v578, 0
  %583 = vmatprep.subr.mxu0 0.0
  %584 = vmatpush1.msra.mxu0 0.0
  %585 = vmatprep.subr.mxu0 0.0
  %586 = vmatpush1.msra.mxu0 0.0
  %587 = vmatprep.subr.mxu0 0.0
  %588 = vmatpush1.msra.mxu0 0.0
  %589 = vmatprep.subr.mxu0 0.0
  %590 = vmatpush1.msra.mxu0 0.0
  %591 = vmatprep.subr.mxu0 0.0
  %592 = vmatpush1.msra.mxu0 0.0
  %593 = vmatprep.subr.mxu0 0.0
  %594 = vmatpush1.msra.mxu0 0.0
  %595 = vmatprep.subr.mxu0 0.0
  %596 = vmatpush1.msra.mxu0 0.0
  %597 = vmatprep.subr.mxu0 0.0
  %598 = vmatpush1.msra.mxu0 0.0
  %599 = vmatprep.subr.mxu0 0.0
  %600 = vmatpush1.msra.mxu0 0.0
  %601 = vmatprep.subr.mxu0 0.0
  %602 = vmatpush1.msra.mxu0 0.0
  %603 = vmatprep.subr.mxu0 0.0
  %604 = vmatpush1.msra.mxu0 0.0
  %605 = vmatprep.subr.mxu0 0.0
  %606 = vmatpush1.msra.mxu0 0.0
  %607 = vmatprep.subr.mxu0 0.0
  %608 = vmatpush1.msra.mxu0 %v182
  %609 = vmatprep.subr.mxu0 0.0
  %610 = vmatpush1.msra.mxu0 %v181
  %611 = vmatprep.subr.mxu0 0.0
  %612 = vmatpush1.msra.mxu0 %v180
  %613 = vmatprep.subr.mxu0 0.0
  %614 = vmatpush1.msra.mxu0 %v179
  %615 = vmatprep.subr.mxu0 0.0
  %616 = vmatpush2.msra.mxu0 0.0
  %617 = vmatprep.subr.mxu0 0.0
  %618 = vmatpush2.msra.mxu0 0.0
  %619 = vmatprep.subr.mxu0 0.0
  %620 = vmatpush2.msra.mxu0 0.0
  %621 = vmatprep.subr.mxu0 0.0
  %622 = vmatpush2.msra.mxu0 0.0
  %623 = vmatprep.subr.mxu0 0.0
  %624 = vmatpush2.msra.mxu0 0.0
  %625 = vmatprep.subr.mxu0 0.0
  %626 = vmatpush2.msra.mxu0 0.0
  %627 = vmatprep.subr.mxu0 0.0
  %628 = vmatpush2.msra.mxu0 0.0
  %629 = vmatprep.subr.mxu0 0.0
  %630 = vmatpush2.msra.mxu0 0.0
  %631 = vmatprep.subr.mxu0 0.0
  %632 = vmatpush2.msra.mxu0 0.0
  %633 = vmatprep.subr.mxu0 0.0
  %634 = vmatpush2.msra.mxu0 0.0
  %635 = vmatprep.subr.mxu0 0.0
  %636 = vmatpush2.msra.mxu0 0.0
  %637 = vmatprep.subr.mxu0 0.0
  %638 = vmatpush2.msra.mxu0 0.0
  %639 = vmatprep.subr.mxu0 0.0
  %640 = vmatpush2.msra.mxu0 0.0
  %641 = vmatprep.subr.mxu0 0.0
  %642 = vmatpush2.msra.mxu0 0.0
  %643 = vmatprep.subr.mxu0 0.0
  %644 = vmatpush2.msra.mxu0 0.0
  %645 = vmatprep.subr.mxu0 0.0
  %646 = vmatpush2.msra.mxu0 0.0
  %647 = vmatprep.mubr.f32.mxu0 0.0
  %648 = vmatmul.mubr.f32.gmra.mxu0 %v581
  %v649 = vpop.f32.mrf.mxu0
  %v650 = vadd.f32 0.0, %v649
  %v651 = vpop.f32.mrf.mxu0
  %652 = vdwg.mxu0
  %v653 = vadd.f32 %v154, %v650
  %v654 = vmul.f32 %v653, %v177
  %v655 = vtanh.pop %v654
  %v656 = vmul.f32 %v655, %v177
  %v657 = vadd.f32 %v656, %v178
  %v658 = vmul.f32 %v657, %v569
  %660 = vrot.lane.b32.xlu0 %v657, 64
  %v661 = vpop.permute.xlu0 %660
  %v663 = vmul.f32 %v657, %v661
  %665 = vrot.lane.b32.xlu0 %v663, 32
  %v666 = vpop.permute.xlu0 %665
  %v668 = vadd.f32 %v658, %v666
  %v669 = vtanh.pop %v668
  %671 = vrot.lane.b32.xlu0 %v669, 64
  %v672 = vpop.permute.xlu0 %671
  %v674 = vmul.f32 %v657, %v672
  %676 = vrot.lane.b32.xlu0 %v674, 32
  %v677 = vpop.permute.xlu0 %676
  %679 = vst.msk [vmem:[#allocation2 + $0x20] sm:$0xff] %vm183, %v677
  %v680 = vsel %vm183, %v677, 0
  %682 = vmatprep.subr.mxu0 0.0
  %683 = vmatpush1.msra.mxu0 0.0
  %684 = vmatprep.subr.mxu0 0.0
  %685 = vmatpush1.msra.mxu0 0.0
  %686 = vmatprep.subr.mxu0 0.0
  %687 = vmatpush1.msra.mxu0 0.0
  %688 = vmatprep.subr.mxu0 0.0
  %689 = vmatpush1.msra.mxu0 0.0
  %690 = vmatprep.subr.mxu0 0.0
  %691 = vmatpush1.msra.mxu0 0.0
  %692 = vmatprep.subr.mxu0 0.0
  %693 = vmatpush1.msra.mxu0 0.0
  %694 = vmatprep.subr.mxu0 0.0
  %695 = vmatpush1.msra.mxu0 0.0
  %696 = vmatprep.subr.mxu0 0.0
  %697 = vmatpush1.msra.mxu0 0.0
  %698 = vmatprep.subr.mxu0 0.0
  %699 = vmatpush1.msra.mxu0 0.0
  %700 = vmatprep.subr.mxu0 0.0
  %701 = vmatpush1.msra.mxu0 0.0
  %702 = vmatprep.subr.mxu0 0.0
  %703 = vmatpush1.msra.mxu0 0.0
  %704 = vmatprep.subr.mxu0 0.0
  %705 = vmatpush1.msra.mxu0 0.0
  %706 = vmatprep.subr.mxu0 0.0
  %707 = vmatpush1.msra.mxu0 %v182
  %708 = vmatprep.subr.mxu0 0.0
  %709 = vmatpush1.msra.mxu0 %v181
  %710 = vmatprep.subr.mxu0 0.0
  %711 = vmatpush1.msra.mxu0 %v180
  %712 = vmatprep.subr.mxu0 0.0
  %713 = vmatpush1.msra.mxu0 %v179
  %714 = vmatprep.subr.mxu0 0.0
  %715 = vmatpush2.msra.mxu0 0.0
  %716 = vmatprep.subr.mxu0 0.0
  %717 = vmatpush2.msra.mxu0 0.0
  %718 = vmatprep.subr.mxu0 0.0
  %719 = vmatpush2.msra.mxu0 0.0
  %720 = vmatprep.subr.mxu0 0.0
  %721 = vmatpush2.msra.mxu0 0.0
  %722 = vmatprep.subr.mxu0 0.0
  %723 = vmatpush2.msra.mxu0 0.0
  %724 = vmatprep.subr.mxu0 0.0
  %725 = vmatpush2.msra.mxu0 0.0
  %726 = vmatprep.subr.mxu0 0.0
  %727 = vmatpush2.msra.mxu0 0.0
  %728 = vmatprep.subr.mxu0 0.0
  %729 = vmatpush2.msra.mxu0 0.0
  %730 = vmatprep.subr.mxu0 0.0
  %731 = vmatpush2.msra.mxu0 0.0
  %732 = vmatprep.subr.mxu0 0.0
  %733 = vmatpush2.msra.mxu0 0.0
  %734 = vmatprep.subr.mxu0 0.0
  %735 = vmatpush2.msra.mxu0 0.0
  %736 = vmatprep.subr.mxu0 0.0
  %737 = vmatpush2.msra.mxu0 0.0
  %738 = vmatprep.subr.mxu0 0.0
  %739 = vmatpush2.msra.mxu0 0.0
  %740 = vmatprep.subr.mxu0 0.0
  %741 = vmatpush2.msra.mxu0 0.0
  %742 = vmatprep.subr.mxu0 0.0
  %743 = vmatpush2.msra.mxu0 0.0
  %744 = vmatprep.subr.mxu0 0.0
  %745 = vmatpush2.msra.mxu0 0.0
  %746 = vmatprep.mubr.f32.mxu0 0.0
  %747 = vmatmul.mubr.f32.gmra.mxu0 %v680
  %v748 = vpop.f32.mrf.mxu0
  %v749 = vadd.f32 0.0, %v748
  %v750 = vpop.f32.mrf.mxu0
  %751 = vdwg.mxu0
  %v752 = vadd.f32 %v159, %v749
  %v753 = vmul.f32 %v752, %v177
  %v754 = vtanh.pop %v753
  %v755 = vmul.f32 %v754, %v177
  %v756 = vadd.f32 %v755, %v178
  %v757 = vmul.f32 %v756, %v668
  %759 = vrot.lane.b32.xlu0 %v756, 64
  %v760 = vpop.permute.xlu0 %759
  %v762 = vmul.f32 %v756, %v760
  %764 = vrot.lane.b32.xlu0 %v762, 32
  %v765 = vpop.permute.xlu0 %764
  %v767 = vadd.f32 %v757, %v765
  %v768 = vtanh.pop %v767
  %770 = vrot.lane.b32.xlu0 %v768, 64
  %v771 = vpop.permute.xlu0 %770
  %v773 = vmul.f32 %v756, %v771
  %775 = vrot.lane.b32.xlu0 %v773, 32
  %v776 = vpop.permute.xlu0 %775
  %778 = vst.msk [vmem:[#allocation2 + $0x28] sm:$0xff] %vm183, %v776
  %v779 = vsel %vm183, %v776, 0
  %781 = vmatprep.subr.mxu0 0.0
  %782 = vmatpush1.msra.mxu0 0.0
  %783 = vmatprep.subr.mxu0 0.0
  %784 = vmatpush1.msra.mxu0 0.0
  %785 = vmatprep.subr.mxu0 0.0
  %786 = vmatpush1.msra.mxu0 0.0
  %787 = vmatprep.subr.mxu0 0.0
  %788 = vmatpush1.msra.mxu0 0.0
  %789 = vmatprep.subr.mxu0 0.0
  %790 = vmatpush1.msra.mxu0 0.0
  %791 = vmatprep.subr.mxu0 0.0
  %792 = vmatpush1.msra.mxu0 0.0
  %793 = vmatprep.subr.mxu0 0.0
  %794 = vmatpush1.msra.mxu0 0.0
  %795 = vmatprep.subr.mxu0 0.0
  %796 = vmatpush1.msra.mxu0 0.0
  %797 = vmatprep.subr.mxu0 0.0
  %798 = vmatpush1.msra.mxu0 0.0
  %799 = vmatprep.subr.mxu0 0.0
  %800 = vmatpush1.msra.mxu0 0.0
  %801 = vmatprep.subr.mxu0 0.0
  %802 = vmatpush1.msra.mxu0 0.0
  %803 = vmatprep.subr.mxu0 0.0
  %804 = vmatpush1.msra.mxu0 0.0
  %805 = vmatprep.subr.mxu0 0.0
  %806 = vmatpush1.msra.mxu0 %v182
  %807 = vmatprep.subr.mxu0 0.0
  %808 = vmatpush1.msra.mxu0 %v181
  %809 = vmatprep.subr.mxu0 0.0
  %810 = vmatpush1.msra.mxu0 %v180
  %811 = vmatprep.subr.mxu0 0.0
  %812 = vmatpush1.msra.mxu0 %v179
  %813 = vmatprep.subr.mxu0 0.0
  %814 = vmatpush2.msra.mxu0 0.0
  %815 = vmatprep.subr.mxu0 0.0
  %816 = vmatpush2.msra.mxu0 0.0
  %817 = vmatprep.subr.mxu0 0.0
  %818 = vmatpush2.msra.mxu0 0.0
  %819 = vmatprep.subr.mxu0 0.0
  %820 = vmatpush2.msra.mxu0 0.0
  %821 = vmatprep.subr.mxu0 0.0
  %822 = vmatpush2.msra.mxu0 0.0
  %823 = vmatprep.subr.mxu0 0.0
  %824 = vmatpush2.msra.mxu0 0.0
  %825 = vmatprep.subr.mxu0 0.0
  %826 = vmatpush2.msra.mxu0 0.0
  %827 = vmatprep.subr.mxu0 0.0
  %828 = vmatpush2.msra.mxu0 0.0
  %829 = vmatprep.subr.mxu0 0.0
  %830 = vmatpush2.msra.mxu0 0.0
  %831 = vmatprep.subr.mxu0 0.0
  %832 = vmatpush2.msra.mxu0 0.0
  %833 = vmatprep.subr.mxu0 0.0
  %834 = vmatpush2.msra.mxu0 0.0
  %835 = vmatprep.subr.mxu0 0.0
  %836 = vmatpush2.msra.mxu0 0.0
  %837 = vmatprep.subr.mxu0 0.0
  %838 = vmatpush2.msra.mxu0 0.0
  %839 = vmatprep.subr.mxu0 0.0
  %840 = vmatpush2.msra.mxu0 0.0
  %841 = vmatprep.subr.mxu0 0.0
  %842 = vmatpush2.msra.mxu0 0.0
  %843 = vmatprep.subr.mxu0 0.0
  %844 = vmatpush2.msra.mxu0 0.0
  %845 = vmatprep.mubr.f32.mxu0 0.0
  %846 = vmatmul.mubr.f32.gmra.mxu0 %v779
  %v847 = vpop.f32.mrf.mxu0
  %v848 = vadd.f32 0.0, %v847
  %v849 = vpop.f32.mrf.mxu0
  %850 = vdwg.mxu0
  %v851 = vadd.f32 %v164, %v848
  %v852 = vmul.f32 %v851, %v177
  %v853 = vtanh.pop %v852
  %v854 = vmul.f32 %v853, %v177
  %v855 = vadd.f32 %v854, %v178
  %v856 = vmul.f32 %v855, %v767
  %858 = vrot.lane.b32.xlu0 %v855, 64
  %v859 = vpop.permute.xlu0 %858
  %v861 = vmul.f32 %v855, %v859
  %863 = vrot.lane.b32.xlu0 %v861, 32
  %v864 = vpop.permute.xlu0 %863
  %v866 = vadd.f32 %v856, %v864
  %v867 = vtanh.pop %v866
  %869 = vrot.lane.b32.xlu0 %v867, 64
  %v870 = vpop.permute.xlu0 %869
  %v872 = vmul.f32 %v855, %v870
  %874 = vrot.lane.b32.xlu0 %v872, 32
  %v875 = vpop.permute.xlu0 %874
  %877 = vst.msk [vmem:[#allocation2 + $0x30] sm:$0xff] %vm183, %v875
  %v878 = vsel %vm183, %v875, 0
  %880 = vmatprep.subr.mxu0 0.0
  %881 = vmatpush1.msra.mxu0 0.0
  %882 = vmatprep.subr.mxu0 0.0
  %883 = vmatpush1.msra.mxu0 0.0
  %884 = vmatprep.subr.mxu0 0.0
  %885 = vmatpush1.msra.mxu0 0.0
  %886 = vmatprep.subr.mxu0 0.0
  %887 = vmatpush1.msra.mxu0 0.0
  %888 = vmatprep.subr.mxu0 0.0
  %889 = vmatpush1.msra.mxu0 0.0
  %890 = vmatprep.subr.mxu0 0.0
  %891 = vmatpush1.msra.mxu0 0.0
  %892 = vmatprep.subr.mxu0 0.0
  %893 = vmatpush1.msra.mxu0 0.0
  %894 = vmatprep.subr.mxu0 0.0
  %895 = vmatpush1.msra.mxu0 0.0
  %896 = vmatprep.subr.mxu0 0.0
  %897 = vmatpush1.msra.mxu0 0.0
  %898 = vmatprep.subr.mxu0 0.0
  %899 = vmatpush1.msra.mxu0 0.0
  %900 = vmatprep.subr.mxu0 0.0
  %901 = vmatpush1.msra.mxu0 0.0
  %902 = vmatprep.subr.mxu0 0.0
  %903 = vmatpush1.msra.mxu0 0.0
  %904 = vmatprep.subr.mxu0 0.0
  %905 = vmatpush1.msra.mxu0 %v182
  %906 = vmatprep.subr.mxu0 0.0
  %907 = vmatpush1.msra.mxu0 %v181
  %908 = vmatprep.subr.mxu0 0.0
  %909 = vmatpush1.msra.mxu0 %v180
  %910 = vmatprep.subr.mxu0 0.0
  %911 = vmatpush1.msra.mxu0 %v179
  %912 = vmatprep.subr.mxu0 0.0
  %913 = vmatpush2.msra.mxu0 0.0
  %914 = vmatprep.subr.mxu0 0.0
  %915 = vmatpush2.msra.mxu0 0.0
  %916 = vmatprep.subr.mxu0 0.0
  %917 = vmatpush2.msra.mxu0 0.0
  %918 = vmatprep.subr.mxu0 0.0
  %919 = vmatpush2.msra.mxu0 0.0
  %920 = vmatprep.subr.mxu0 0.0
  %921 = vmatpush2.msra.mxu0 0.0
  %922 = vmatprep.subr.mxu0 0.0
  %923 = vmatpush2.msra.mxu0 0.0
  %924 = vmatprep.subr.mxu0 0.0
  %925 = vmatpush2.msra.mxu0 0.0
  %926 = vmatprep.subr.mxu0 0.0
  %927 = vmatpush2.msra.mxu0 0.0
  %928 = vmatprep.subr.mxu0 0.0
  %929 = vmatpush2.msra.mxu0 0.0
  %930 = vmatprep.subr.mxu0 0.0
  %931 = vmatpush2.msra.mxu0 0.0
  %932 = vmatprep.subr.mxu0 0.0
  %933 = vmatpush2.msra.mxu0 0.0
  %934 = vmatprep.subr.mxu0 0.0
  %935 = vmatpush2.msra.mxu0 0.0
  %936 = vmatprep.subr.mxu0 0.0
  %937 = vmatpush2.msra.mxu0 0.0
  %938 = vmatprep.subr.mxu0 0.0
  %939 = vmatpush2.msra.mxu0 0.0
  %940 = vmatprep.subr.mxu0 0.0
  %941 = vmatpush2.msra.mxu0 0.0
  %942 = vmatprep.subr.mxu0 0.0
  %943 = vmatpush2.msra.mxu0 0.0
  %944 = vmatprep.mubr.f32.mxu0 0.0
  %945 = vmatmul.mubr.f32.gmra.mxu0 %v878
  %v946 = vpop.f32.mrf.mxu0
  %v947 = vadd.f32 0.0, %v946
  %v948 = vpop.f32.mrf.mxu0
  %949 = vdwg.mxu0
  %v950 = vadd.f32 %v169, %v947
  %v951 = vmul.f32 %v950, %v177
  %v952 = vtanh.pop %v951
  %v953 = vmul.f32 %v952, %v177
  %v954 = vadd.f32 %v953, %v178
  %v955 = vmul.f32 %v954, %v866
  %957 = vrot.lane.b32.xlu0 %v954, 64
  %v958 = vpop.permute.xlu0 %957
  %v960 = vmul.f32 %v954, %v958
  %962 = vrot.lane.b32.xlu0 %v960, 32
  %v963 = vpop.permute.xlu0 %962
  %v965 = vadd.f32 %v955, %v963
  %v966 = vtanh.pop %v965
  %968 = vrot.lane.b32.xlu0 %v966, 64
  %v969 = vpop.permute.xlu0 %968
  %v971 = vmul.f32 %v954, %v969
  %973 = vrot.lane.b32.xlu0 %v971, 32
  %v974 = vpop.permute.xlu0 %973
  %976 = vst.msk [vmem:[#allocation2 + $0x38] sm:$0xff] %vm183, %v974
  %v977 = vld [vmem:[#allocation2] sm:$0xff]
  %v978 = vld [vmem:[#allocation2 + $0x8] sm:$0xff]
  %v979 = vld [vmem:[#allocation2 + $0x10] sm:$0xff]
  %v980 = vld [vmem:[#allocation2 + $0x18] sm:$0xff]
  %v981 = vld [vmem:[#allocation2 + $0x20] sm:$0xff]
  %v982 = vld [vmem:[#allocation2 + $0x28] sm:$0xff]
  %v983 = vld [vmem:[%s4] sm:$0xff]
  %v984 = vld [vmem:[%s4 + $0x8] sm:$0xff]
  %v985 = vld [vmem:[%s4 + $0x10] sm:$0xff]
  %v986 = vld [vmem:[%s4 + $0x18] sm:$0xff]
  %v987 = vld [vmem:[#allocation2 + $0x30] sm:$0xff]
  %v988 = vld [vmem:[%s4 + $0x20] sm:$0xff]
  %v989 = vld [vmem:[%s4 + $0x28] sm:$0xff]
  %v990 = vld [vmem:[%s4 + $0x30] sm:$0xff]
  %v991 = vld [vmem:[%s4 + $0x38] sm:$0xff]
  %v993 = vsel %vm183, %v978, 0
  %v996 = vsel %vm183, %v979, 0
  %v999 = vsel %vm183, %v980, 0
  %v1002 = vsel %vm183, %v981, 0
  %v1005 = vsel %vm183, %v982, 0
  %v1008 = vsel %vm183, %v987, 0
  %1010 = vmatprep.subr.mxu0 0.0
  %1011 = vmatpush1.msra.mxu0 0.0
  %1012 = vmatprep.subr.mxu0 0.0
  %1013 = vmatpush1.msra.mxu0 0.0
  %1014 = vmatprep.subr.mxu0 0.0
  %1015 = vmatpush1.msra.mxu0 0.0
  %1016 = vmatprep.subr.mxu0 0.0
  %1017 = vmatpush1.msra.mxu0 0.0
  %1018 = vmatprep.subr.mxu0 0.0
  %1019 = vmatpush1.msra.mxu0 0.0
  %1020 = vmatprep.subr.mxu0 0.0
  %1021 = vmatpush1.msra.mxu0 0.0
  %1022 = vmatprep.subr.mxu0 0.0
  %1023 = vmatpush1.msra.mxu0 0.0
  %1024 = vmatprep.subr.mxu0 0.0
  %1025 = vmatpush1.msra.mxu0 0.0
  %1026 = vmatprep.subr.mxu0 0.0
  %1027 = vmatpush1.msra.mxu0 0.0
  %1028 = vmatprep.subr.mxu0 0.0
  %1029 = vmatpush1.msra.mxu0 0.0
  %1030 = vmatprep.subr.mxu0 0.0
  %1031 = vmatpush1.msra.mxu0 0.0
  %1032 = vmatprep.subr.mxu0 0.0
  %1033 = vmatpush1.msra.mxu0 0.0
  %1034 = vmatprep.subr.mxu0 0.0
  %1035 = vmatpush1.msra.mxu0 %v991
  %1036 = vmatprep.subr.mxu0 0.0
  %1037 = vmatpush1.msra.mxu0 %v990
  %1038 = vmatprep.subr.mxu0 0.0
  %1039 = vmatpush1.msra.mxu0 %v989
  %1040 = vmatprep.subr.mxu0 0.0
  %1041 = vmatpush1.msra.mxu0 %v988
  %1042 = vmatprep.subr.mxu0 0.0
  %1043 = vmatpush2.msra.mxu0 0.0
  %1044 = vmatprep.subr.mxu0 0.0
  %1045 = vmatpush2.msra.mxu0 0.0
  %1046 = vmatprep.subr.mxu0 0.0
  %1047 = vmatpush2.msra.mxu0 0.0
  %1048 = vmatprep.subr.mxu0 0.0
  %1049 = vmatpush2.msra.mxu0 0.0
  %1050 = vmatprep.subr.mxu0 0.0
  %1051 = vmatpush2.msra.mxu0 0.0
  %1052 = vmatprep.subr.mxu0 0.0
  %1053 = vmatpush2.msra.mxu0 0.0
  %1054 = vmatprep.subr.mxu0 0.0
  %1055 = vmatpush2.msra.mxu0 0.0
  %1056 = vmatprep.subr.mxu0 0.0
  %1057 = vmatpush2.msra.mxu0 0.0
  %1058 = vmatprep.subr.mxu0 0.0
  %1059 = vmatpush2.msra.mxu0 0.0
  %1060 = vmatprep.subr.mxu0 0.0
  %1061 = vmatpush2.msra.mxu0 0.0
  %1062 = vmatprep.subr.mxu0 0.0
  %1063 = vmatpush2.msra.mxu0 0.0
  %1064 = vmatprep.subr.mxu0 0.0
  %1065 = vmatpush2.msra.mxu0 0.0
  %1066 = vmatprep.subr.mxu0 0.0
  %1067 = vmatpush2.msra.mxu0 0.0
  %1068 = vmatprep.subr.mxu0 0.0
  %1069 = vmatpush2.msra.mxu0 0.0
  %1070 = vmatprep.subr.mxu0 0.0
  %1071 = vmatpush2.msra.mxu0 0.0
  %1072 = vmatprep.subr.mxu0 0.0
  %1073 = vmatpush2.msra.mxu0 0.0
  %1074 = vmatprep.mubr.f32.mxu0 0.0
  %1075 = vmatmul.mubr.f32.gmra.mxu0 %v993
  %v1076 = vpop.f32.mrf.mxu0
  %v1077 = vadd.f32 0.0, %v1076
  %v1078 = vpop.f32.mrf.mxu0
  %1079 = vmatprep.mubr.f32.mxu0 0.0
  %1080 = vmatmul.mubr.f32.gmra.mxu0 %v996
  %v1081 = vpop.f32.mrf.mxu0
  %v1082 = vadd.f32 0.0, %v1081
  %v1083 = vpop.f32.mrf.mxu0
  %1084 = vmatprep.mubr.f32.mxu0 0.0
  %1085 = vmatmul.mubr.f32.gmra.mxu0 %v999
  %v1086 = vpop.f32.mrf.mxu0
  %v1087 = vadd.f32 0.0, %v1086
  %v1088 = vpop.f32.mrf.mxu0
  %1089 = vmatprep.mubr.f32.mxu0 0.0
  %1090 = vmatmul.mubr.f32.gmra.mxu0 %v1002
  %v1091 = vpop.f32.mrf.mxu0
  %v1092 = vadd.f32 0.0, %v1091
  %v1093 = vpop.f32.mrf.mxu0
  %1094 = vmatprep.mubr.f32.mxu0 0.0
  %1095 = vmatmul.mubr.f32.gmra.mxu0 %v1005
  %v1096 = vpop.f32.mrf.mxu0
  %v1097 = vadd.f32 0.0, %v1096
  %v1098 = vpop.f32.mrf.mxu0
  %1099 = vmatprep.mubr.f32.mxu0 0.0
  %1100 = vmatmul.mubr.f32.gmra.mxu0 %v1008
  %v1101 = vpop.f32.mrf.mxu0
  %v1102 = vadd.f32 0.0, %v1101
  %v1103 = vpop.f32.mrf.mxu0
  %1104 = vdwg.mxu0
  %v1106 = vsel %vm183, %v977, 0
  %1108 = vmatprep.subr.mxu0 0.0
  %1109 = vmatpush1.msra.mxu0 0.0
  %1110 = vmatprep.subr.mxu0 0.0
  %1111 = vmatpush1.msra.mxu0 0.0
  %1112 = vmatprep.subr.mxu0 0.0
  %1113 = vmatpush1.msra.mxu0 0.0
  %1114 = vmatprep.subr.mxu0 0.0
  %1115 = vmatpush1.msra.mxu0 0.0
  %1116 = vmatprep.subr.mxu0 0.0
  %1117 = vmatpush1.msra.mxu0 0.0
  %1118 = vmatprep.subr.mxu0 0.0
  %1119 = vmatpush1.msra.mxu0 0.0
  %1120 = vmatprep.subr.mxu0 0.0
  %1121 = vmatpush1.msra.mxu0 0.0
  %1122 = vmatprep.subr.mxu0 0.0
  %1123 = vmatpush1.msra.mxu0 0.0
  %1124 = vmatprep.subr.mxu0 0.0
  %1125 = vmatpush1.msra.mxu0 0.0
  %1126 = vmatprep.subr.mxu0 0.0
  %1127 = vmatpush1.msra.mxu0 0.0
  %1128 = vmatprep.subr.mxu0 0.0
  %1129 = vmatpush1.msra.mxu0 0.0
  %1130 = vmatprep.subr.mxu0 0.0
  %1131 = vmatpush1.msra.mxu0 0.0
  %1132 = vmatprep.subr.mxu0 0.0
  %1133 = vmatpush1.msra.mxu0 %v986
  %1134 = vmatprep.subr.mxu0 0.0
  %1135 = vmatpush1.msra.mxu0 %v985
  %1136 = vmatprep.subr.mxu0 0.0
  %1137 = vmatpush1.msra.mxu0 %v984
  %1138 = vmatprep.subr.mxu0 0.0
  %1139 = vmatpush1.msra.mxu0 %v983
  %1140 = vmatprep.subr.mxu0 0.0
  %1141 = vmatpush2.msra.mxu0 0.0
  %1142 = vmatprep.subr.mxu0 0.0
  %1143 = vmatpush2.msra.mxu0 0.0
  %1144 = vmatprep.subr.mxu0 0.0
  %1145 = vmatpush2.msra.mxu0 0.0
  %1146 = vmatprep.subr.mxu0 0.0
  %1147 = vmatpush2.msra.mxu0 0.0
  %1148 = vmatprep.subr.mxu0 0.0
  %1149 = vmatpush2.msra.mxu0 0.0
  %1150 = vmatprep.subr.mxu0 0.0
  %1151 = vmatpush2.msra.mxu0 0.0
  %1152 = vmatprep.subr.mxu0 0.0
  %1153 = vmatpush2.msra.mxu0 0.0
  %1154 = vmatprep.subr.mxu0 0.0
  %1155 = vmatpush2.msra.mxu0 0.0
  %1156 = vmatprep.subr.mxu0 0.0
  %1157 = vmatpush2.msra.mxu0 0.0
  %1158 = vmatprep.subr.mxu0 0.0
  %1159 = vmatpush2.msra.mxu0 0.0
  %1160 = vmatprep.subr.mxu0 0.0
  %1161 = vmatpush2.msra.mxu0 0.0
  %1162 = vmatprep.subr.mxu0 0.0
  %1163 = vmatpush2.msra.mxu0 0.0
  %1164 = vmatprep.subr.mxu0 0.0
  %1165 = vmatpush2.msra.mxu0 0.0
  %1166 = vmatprep.subr.mxu0 0.0
  %1167 = vmatpush2.msra.mxu0 0.0
  %1168 = vmatprep.subr.mxu0 0.0
  %1169 = vmatpush2.msra.mxu0 0.0
  %1170 = vmatprep.subr.mxu0 0.0
  %1171 = vmatpush2.msra.mxu0 0.0
  %1172 = vmatprep.mubr.f32.mxu0 0.0
  %1173 = vmatmul.mubr.f32.gmra.mxu0 %v1106
  %v1174 = vpop.f32.mrf.mxu0
  %v1175 = vadd.f32 %v1077, %v1174
  %v1176 = vpop.f32.mrf.mxu0
  %1177 = vmatprep.mubr.f32.mxu0 0.0
  %1178 = vmatmul.mubr.f32.gmra.mxu0 %v993
  %v1179 = vpop.f32.mrf.mxu0
  %v1180 = vadd.f32 %v1082, %v1179
  %v1181 = vpop.f32.mrf.mxu0
  %1182 = vmatprep.mubr.f32.mxu0 0.0
  %1183 = vmatmul.mubr.f32.gmra.mxu0 %v996
  %v1184 = vpop.f32.mrf.mxu0
  %v1185 = vadd.f32 %v1087, %v1184
  %v1186 = vpop.f32.mrf.mxu0
  %1187 = vmatprep.mubr.f32.mxu0 0.0
  %1188 = vmatmul.mubr.f32.gmra.mxu0 %v999
  %v1189 = vpop.f32.mrf.mxu0
  %v1190 = vadd.f32 %v1092, %v1189
  %v1191 = vpop.f32.mrf.mxu0
  %1192 = vmatprep.mubr.f32.mxu0 0.0
  %1193 = vmatmul.mubr.f32.gmra.mxu0 %v1002
  %v1194 = vpop.f32.mrf.mxu0
  %v1195 = vadd.f32 %v1097, %v1194
  %v1196 = vpop.f32.mrf.mxu0
  %1197 = vmatprep.mubr.f32.mxu0 0.0
  %1198 = vmatmul.mubr.f32.gmra.mxu0 %v1005
  %v1199 = vpop.f32.mrf.mxu0
  %v1200 = vadd.f32 %v1102, %v1199
  %v1201 = vpop.f32.mrf.mxu0
  %1202 = vdwg.mxu0
  %v1203 = vld [vmem:[#allocation2 + $0x10] sm:$0xff]
  %v1204 = vld [vmem:[#allocation2 + $0x18] sm:$0xff]
  %v1205 = vld [vmem:[#allocation2 + $0x20] sm:$0xff]
  %v1206 = vld [vmem:[#allocation2 + $0x28] sm:$0xff]
  %v1207 = vld [vmem:[#allocation2 + $0x30] sm:$0xff]
  %v1208 = vld [vmem:[#allocation2 + $0x38] sm:$0xff]
  %v1209 = vld [vmem:[%s4 + $0x40] sm:$0xff]
  %v1210 = vld [vmem:[%s4 + $0x48] sm:$0xff]
  %v1211 = vld [vmem:[%s4 + $0x50] sm:$0xff]
  %v1212 = vld [vmem:[%s4 + $0x58] sm:$0xff]
  %v1214 = vsel %vm183, %v1203, 0
  %v1217 = vsel %vm183, %v1204, 0
  %v1220 = vsel %vm183, %v1205, 0
  %v1223 = vsel %vm183, %v1206, 0
  %v1226 = vsel %vm183, %v1207, 0
  %v1229 = vsel %vm183, %v1208, 0
  %1231 = vmatprep.subr.mxu0 0.0
  %1232 = vmatpush1.msra.mxu0 0.0
  %1233 = vmatprep.subr.mxu0 0.0
  %1234 = vmatpush1.msra.mxu0 0.0
  %1235 = vmatprep.subr.mxu0 0.0
  %1236 = vmatpush1.msra.mxu0 0.0
  %1237 = vmatprep.subr.mxu0 0.0
  %1238 = vmatpush1.msra.mxu0 0.0
  %1239 = vmatprep.subr.mxu0 0.0
  %1240 = vmatpush1.msra.mxu0 0.0
  %1241 = vmatprep.subr.mxu0 0.0
  %1242 = vmatpush1.msra.mxu0 0.0
  %1243 = vmatprep.subr.mxu0 0.0
  %1244 = vmatpush1.msra.mxu0 0.0
  %1245 = vmatprep.subr.mxu0 0.0
  %1246 = vmatpush1.msra.mxu0 0.0
  %1247 = vmatprep.subr.mxu0 0.0
  %1248 = vmatpush1.msra.mxu0 0.0
  %1249 = vmatprep.subr.mxu0 0.0
  %1250 = vmatpush1.msra.mxu0 0.0
  %1251 = vmatprep.subr.mxu0 0.0
  %1252 = vmatpush1.msra.mxu0 0.0
  %1253 = vmatprep.subr.mxu0 0.0
  %1254 = vmatpush1.msra.mxu0 0.0
  %1255 = vmatprep.subr.mxu0 0.0
  %1256 = vmatpush1.msra.mxu0 %v1212
  %1257 = vmatprep.subr.mxu0 0.0
  %1258 = vmatpush1.msra.mxu0 %v1211
  %1259 = vmatprep.subr.mxu0 0.0
  %1260 = vmatpush1.msra.mxu0 %v1210
  %1261 = vmatprep.subr.mxu0 0.0
  %1262 = vmatpush1.msra.mxu0 %v1209
  %1263 = vmatprep.subr.mxu0 0.0
  %1264 = vmatpush2.msra.mxu0 0.0
  %1265 = vmatprep.subr.mxu0 0.0
  %1266 = vmatpush2.msra.mxu0 0.0
  %1267 = vmatprep.subr.mxu0 0.0
  %1268 = vmatpush2.msra.mxu0 0.0
  %1269 = vmatprep.subr.mxu0 0.0
  %1270 = vmatpush2.msra.mxu0 0.0
  %1271 = vmatprep.subr.mxu0 0.0
  %1272 = vmatpush2.msra.mxu0 0.0
  %1273 = vmatprep.subr.mxu0 0.0
  %1274 = vmatpush2.msra.mxu0 0.0
  %1275 = vmatprep.subr.mxu0 0.0
  %1276 = vmatpush2.msra.mxu0 0.0
  %1277 = vmatprep.subr.mxu0 0.0
  %1278 = vmatpush2.msra.mxu0 0.0
  %1279 = vmatprep.subr.mxu0 0.0
  %1280 = vmatpush2.msra.mxu0 0.0
  %1281 = vmatprep.subr.mxu0 0.0
  %1282 = vmatpush2.msra.mxu0 0.0
  %1283 = vmatprep.subr.mxu0 0.0
  %1284 = vmatpush2.msra.mxu0 0.0
  %1285 = vmatprep.subr.mxu0 0.0
  %1286 = vmatpush2.msra.mxu0 0.0
  %1287 = vmatprep.subr.mxu0 0.0
  %1288 = vmatpush2.msra.mxu0 0.0
  %1289 = vmatprep.subr.mxu0 0.0
  %1290 = vmatpush2.msra.mxu0 0.0
  %1291 = vmatprep.subr.mxu0 0.0
  %1292 = vmatpush2.msra.mxu0 0.0
  %1293 = vmatprep.subr.mxu0 0.0
  %1294 = vmatpush2.msra.mxu0 0.0
  %1295 = vmatprep.mubr.f32.mxu0 0.0
  %1296 = vmatmul.mubr.f32.gmra.mxu0 %v1214
  %v1297 = vpop.f32.mrf.mxu0
  %v1298 = vadd.f32 0.0, %v1297
  %v1299 = vpop.f32.mrf.mxu0
  %1300 = vmatprep.mubr.f32.mxu0 0.0
  %1301 = vmatmul.mubr.f32.gmra.mxu0 %v1217
  %v1302 = vpop.f32.mrf.mxu0
  %v1303 = vadd.f32 0.0, %v1302
  %v1304 = vpop.f32.mrf.mxu0
  %1305 = vmatprep.mubr.f32.mxu0 0.0
  %1306 = vmatmul.mubr.f32.gmra.mxu0 %v1220
  %v1307 = vpop.f32.mrf.mxu0
  %v1308 = vadd.f32 0.0, %v1307
  %v1309 = vpop.f32.mrf.mxu0
  %1310 = vmatprep.mubr.f32.mxu0 0.0
  %1311 = vmatmul.mubr.f32.gmra.mxu0 %v1223
  %v1312 = vpop.f32.mrf.mxu0
  %v1313 = vadd.f32 0.0, %v1312
  %v1314 = vpop.f32.mrf.mxu0
  %1315 = vmatprep.mubr.f32.mxu0 0.0
  %1316 = vmatmul.mubr.f32.gmra.mxu0 %v1226
  %v1317 = vpop.f32.mrf.mxu0
  %v1318 = vadd.f32 0.0, %v1317
  %v1319 = vpop.f32.mrf.mxu0
  %1320 = vmatprep.mubr.f32.mxu0 0.0
  %1321 = vmatmul.mubr.f32.gmra.mxu0 %v1229
  %v1322 = vpop.f32.mrf.mxu0
  %v1323 = vadd.f32 0.0, %v1322
  %v1324 = vpop.f32.mrf.mxu0
  %1325 = vdwg.mxu0
  %v1326 = vadd.f32 %v1175, %v1298
  %v1327 = vadd.f32 %v1180, %v1303
  %v1328 = vadd.f32 %v1185, %v1308
  %v1329 = vadd.f32 %v1190, %v1313
  %v1330 = vadd.f32 %v1195, %v1318
  %v1331 = vadd.f32 %v1200, %v1323
  %1332 = vst [vmem:[%s5] sm:$0xff] %v1326
  %1333 = vst [vmem:[%s5 + $0x8] sm:$0xff] %v1327
  %1334 = vst [vmem:[%s5 + $0x10] sm:$0xff] %v1328
  %1335 = vst [vmem:[%s5 + $0x18] sm:$0xff] %v1329
  %1336 = vst [vmem:[%s5 + $0x20] sm:$0xff] %v1330
  %1337 = vst [vmem:[%s5 + $0x28] sm:$0xff] %v1331
  // Predicated region
  $region22: #{auvi_subnet_forward.1} parent=0 // pred_check
    _
  $region23: #{auvi_subnet_forward.1} parent=0 // pred_check_branch
    %1339 = sbr.rel (0) target = $region25
  $region24: #{auvi_subnet_forward.1} parent=0 // pred_region
    _
  $region25: #{auvi_subnet_forward.1} parent=0 // pred_fallthru
    _
  // Predicated region
  $region26: #{auvi_subnet_forward.1} parent=0 // pred_check
    _
  $region27: #{auvi_subnet_forward.1} parent=0 // pred_check_branch
    %1341 = sbr.rel (0) target = $region29
  $region28: #{auvi_subnet_forward.1} parent=0 // pred_region
    _
  $region29: #{auvi_subnet_forward.1} parent=0 // pred_fallthru
    _

</llo_original>
